<compile_context>
chip_gen: v5e
topology: v5e:2x2
jax: 0.10.0
libtpu: 0.0.40
codegen_flags: <defaults>
</compile_context>

<pallas_src>
import jax
import jax.numpy as jnp
from jax.experimental import pallas as pl
from jax.experimental.pallas import tpu as pltpu

_HI = jax.lax.Precision.HIGHEST


def hypernode_kernel(x_ref, w1_ref, e_ref, g_ref, o_ref):
    # x_ref : (TB, L*M)  lane-dense input tile, original dtype (no upcast)
    # w1_ref: (L*M, L)   block-diagonal expansion of theta: W1[l*M+m, l] = theta[m, l]
    # e_ref : (L, L*M)   0/1 broadcast matrix: E[l, l*M+m] = 1
    # g_ref : (L*M, M)   0/1 group-sum matrix: G[l*M+m, m] = 1
    # o_ref : (TB, M)
    x2d = x_ref[...]

    # scores[b, l] = sum_m x[b, l, m] * theta[m, l]   (one MXU matmul, no reshape)
    scores = jnp.dot(x2d, w1_ref[...],
                     preferred_element_type=jnp.float32, precision=_HI)  # (TB, L)

    # numerically stable softmax over L -- only the small (TB, L) slab is f32
    s_max = jnp.max(scores, axis=-1, keepdims=True)
    e = jnp.exp(scores - s_max)
    alpha = e * pl.reciprocal(jnp.sum(e, axis=-1, keepdims=True), approx=False)

    # broadcast alpha to the lane-dense layout via MXU (avoids in-kernel relayout)
    alpha_exp = jnp.dot(alpha, e_ref[...],
                        preferred_element_type=jnp.float32, precision=_HI)  # (TB, L*M)

    # weighted sum: elementwise (VPU) then lane-group reduction on the MXU
    prod = x2d * alpha_exp.astype(x2d.dtype)                                # (TB, L*M)
    out = jnp.dot(prod, g_ref[...],
                  preferred_element_type=jnp.float32, precision=_HI)        # (TB, M)
    o_ref[...] = out.astype(o_ref.dtype)


def hypernode_embedding_forward(x, theta, *, tb=2048):
    """x: (I, J, K, L, M), theta: (M, L) -> out: (I, J, K, M)."""
    I, J, K, L, M = x.shape
    assert theta.shape == (M, L)
    B = I * J * K
    P = L * M

    # Lane-dense presentation of x (free reshape of contiguous data).
    x2d = x.reshape(B, P)

    # Explicit tile: multiple of 8 sublanes, never larger than (padded) B.
    tb = int(min(tb, B))
    tb = max(8, (tb // 8) * 8)
    B_pad = ((B + tb - 1) // tb) * tb
    if B_pad != B:
        x2d = jnp.pad(x2d, ((0, B_pad - B), (0, 0)))

    # Precomputed constant matrices (tiny; shared across all grid steps).
    f32 = jnp.float32
    theta_f = theta.astype(f32)
    eye_L = jnp.eye(L, dtype=f32)
    # W1[l*M+m, l'] = theta[m, l] if l == l' else 0
    w1 = (eye_L[:, None, :] * theta_f.T[:, :, None]).reshape(P, L).astype(x.dtype)
    # E[l, l*M+m] = 1
    e_mat = jnp.repeat(eye_L, M, axis=1)                                   # (L, P) f32
    # G[l*M+m, m] = 1
    g_mat = jnp.tile(jnp.eye(M, dtype=f32), (L, 1)).astype(x.dtype)        # (P, M)

    out_pad = pl.pallas_call(
        hypernode_kernel,
        out_shape=jax.ShapeDtypeStruct((B_pad, M), x.dtype),
        grid_spec=pltpu.PrefetchScalarGridSpec(
            num_scalar_prefetch=0,
            grid=(B_pad // tb,),
            in_specs=[
                pl.BlockSpec((tb, P), lambda i: (i, 0)),
                pl.BlockSpec((P, L), lambda i: (0, 0)),
                pl.BlockSpec((L, P), lambda i: (0, 0)),
                pl.BlockSpec((P, M), lambda i: (0, 0)),
            ],
            out_specs=pl.BlockSpec((tb, M), lambda i: (i, 0)),
        ),
        compiler_params=pltpu.CompilerParams(
            dimension_semantics=("parallel",),
        ),
    )(x2d, w1, e_mat, g_mat)

    # TODO(synk): output last dim M=32 (<128) still stores via masked vst; a
    # packed output layout would need downstream consumers to change layout.
    return out_pad[:B].reshape(I, J, K, M)


def reference_forward(x, theta):
    scores = jnp.einsum("ijklm,ml->ijkl", x, theta, precision=_HI)
    alpha = jax.nn.softmax(scores, axis=-1)
    return jnp.einsum("ijklm,ijkl->ijkm", x, alpha, precision=_HI)


if __name__ == "__main__":
    # Shapes consistent with the module: time_series_len=8, time_series_dim=32
    L = 8    # time_series_len
    M = 32   # time_series_dim

    key = jax.random.PRNGKey(0)
    kx, kt, kx2 = jax.random.split(key, 3)

    theta = jax.random.normal(kt, (M, L), dtype=jnp.float32)  # nn.Parameter(randn(dim, len))

    # Case 1: tiny batch (single grid step).
    I, J, K = 2, 2, 2
    x = jax.random.normal(kx, (I, J, K, L, M), dtype=jnp.float32)
    out = jax.block_until_ready(hypernode_embedding_forward(x, theta))
    ref = reference_forward(x, theta)
    assert out.shape == (I, J, K, M)
    assert jnp.allclose(out, ref, atol=1e-4, rtol=1e-4)

    # Case 2: multi-step pipelined grid + batch padding (B=60, tb=16 -> 4 steps).
    I2, J2, K2 = 3, 4, 5
    x2 = jax.random.normal(kx2, (I2, J2, K2, L, M), dtype=jnp.float32)
    out2 = jax.block_until_ready(hypernode_embedding_forward(x2, theta, tb=16))
    ref2 = reference_forward(x2, theta)
    assert out2.shape == (I2, J2, K2, M)
    assert jnp.allclose(out2, ref2, atol=1e-4, rtol=1e-4)

    print("KERNEL_OK")
</pallas_src>

<mosaic_0001>
module attributes {stable_mosaic.version = 11 : i64} {
  func.func @hypernode_kernel(%arg0: i32, %arg1: memref<8x256xf32, #tpu.memory_space<vmem>>, %arg2: memref<256x8xf32, #tpu.memory_space<vmem>>, %arg3: memref<8x256xf32, #tpu.memory_space<vmem>>, %arg4: memref<256x32xf32, #tpu.memory_space<vmem>>, %arg5: memref<8x32xf32, #tpu.memory_space<vmem>>) attributes {dimension_semantics = [#tpu.dimension_semantics<parallel>], iteration_bounds = array<i64: 1>, scalar_prefetch = 0 : i64, scratch_operands = 0 : i64, tpu.core_type = #tpu.core_type<tc>, window_params = [{transform_indices = @transform_0, window_bounds = array<i64: 8, 256>}, {pipeline_mode = #tpu.pipeline_mode<synchronous>, transform_indices = @transform_1, window_bounds = array<i64: 256, 8>}, {pipeline_mode = #tpu.pipeline_mode<synchronous>, transform_indices = @transform_2, window_bounds = array<i64: 8, 256>}, {pipeline_mode = #tpu.pipeline_mode<synchronous>, transform_indices = @transform_3, window_bounds = array<i64: 256, 32>}, {transform_indices = @transform_4, window_bounds = array<i64: 8, 32>}]} {
    %c0 = arith.constant 0 : index
    %c0_0 = arith.constant 0 : index
    %0 = vector.load %arg1[%c0, %c0_0] : memref<8x256xf32, #tpu.memory_space<vmem>>, vector<8x256xf32>
    %c0_1 = arith.constant 0 : index
    %c0_2 = arith.constant 0 : index
    %1 = vector.load %arg2[%c0_1, %c0_2] : memref<256x8xf32, #tpu.memory_space<vmem>>, vector<256x8xf32>
    %cst = arith.constant dense<0.000000e+00> : vector<8x8xf32>
    %2 = tpu.matmul %0, %1, %cst {dimension_numbers = #tpu.dot_dimension_numbers<[1], [0], [0], [1], [0, 0, 1, 1], [], []>, precision = #tpu.contract_precision<fp32>} : vector<8x256xf32>, vector<256x8xf32>, vector<8x8xf32> -> vector<8x8xf32>
    %cst_3 = arith.constant dense<0xFF800000> : vector<8xf32>
    %3 = vector.multi_reduction <maximumf>, %2, %cst_3 [1] : vector<8x8xf32> to vector<8xf32>
    %4 = vector.shape_cast %3 : vector<8xf32> to vector<8x1xf32>
    %5 = vector.broadcast %4 : vector<8x1xf32> to vector<8x8xf32>
    %6 = arith.subf %2, %5 : vector<8x8xf32>
    %7 = math.exp %6 : vector<8x8xf32>
    %cst_4 = arith.constant dense<0.000000e+00> : vector<8xf32>
    %8 = vector.multi_reduction <add>, %7, %cst_4 [1] : vector<8x8xf32> to vector<8xf32>
    %9 = vector.shape_cast %8 : vector<8xf32> to vector<8x1xf32>
    %10 = tpu.reciprocal %9 : vector<8x1xf32> -> vector<8x1xf32>
    %11 = vector.broadcast %10 : vector<8x1xf32> to vector<8x8xf32>
    %12 = arith.mulf %7, %11 : vector<8x8xf32>
    %c0_5 = arith.constant 0 : index
    %c0_6 = arith.constant 0 : index
    %13 = vector.load %arg3[%c0_5, %c0_6] : memref<8x256xf32, #tpu.memory_space<vmem>>, vector<8x256xf32>
    %cst_7 = arith.constant dense<0.000000e+00> : vector<8x256xf32>
    %14 = tpu.matmul %12, %13, %cst_7 {dimension_numbers = #tpu.dot_dimension_numbers<[1], [0], [0], [1], [0, 0, 1, 1], [], []>, precision = #tpu.contract_precision<fp32>} : vector<8x8xf32>, vector<8x256xf32>, vector<8x256xf32> -> vector<8x256xf32>
    %15 = arith.mulf %0, %14 : vector<8x256xf32>
    %c0_8 = arith.constant 0 : index
    %c0_9 = arith.constant 0 : index
    %16 = vector.load %arg4[%c0_8, %c0_9] : memref<256x32xf32, #tpu.memory_space<vmem>>, vector<256x32xf32>
    %cst_10 = arith.constant dense<0.000000e+00> : vector<8x32xf32>
    %17 = tpu.matmul %15, %16, %cst_10 {dimension_numbers = #tpu.dot_dimension_numbers<[1], [0], [0], [1], [0, 0, 1, 1], [], []>, precision = #tpu.contract_precision<fp32>} : vector<8x256xf32>, vector<256x32xf32>, vector<8x32xf32> -> vector<8x32xf32>
    %c0_11 = arith.constant 0 : index
    %c0_12 = arith.constant 0 : index
    %18 = vector.load %arg5[%c0_11, %c0_12] : memref<8x32xf32, #tpu.memory_space<vmem>>, vector<8x32xf32>
    tpu.vector_store %arg5[%c0_11, %c0_12], %17 {strides = array<i32>} : memref<8x32xf32, #tpu.memory_space<vmem>>, vector<8x32xf32>,
    return
  }
  func.func @transform_0(%arg0: i32) -> (i32, i32) {
    %c0_i32 = arith.constant 0 : i32
    %c0_i32_0 = arith.constant 0 : i32
    return %arg0, %c0_i32 : i32, i32
  }
  func.func @transform_1(%arg0: i32) -> (i32, i32) {
    %c0_i32 = arith.constant 0 : i32
    %c0_i32_0 = arith.constant 0 : i32
    %c0_i32_1 = arith.constant 0 : i32
    return %c0_i32, %c0_i32_0 : i32, i32
  }
  func.func @transform_2(%arg0: i32) -> (i32, i32) {
    %c0_i32 = arith.constant 0 : i32
    %c0_i32_0 = arith.constant 0 : i32
    %c0_i32_1 = arith.constant 0 : i32
    return %c0_i32, %c0_i32_0 : i32, i32
  }
  func.func @transform_3(%arg0: i32) -> (i32, i32) {
    %c0_i32 = arith.constant 0 : i32
    %c0_i32_0 = arith.constant 0 : i32
    %c0_i32_1 = arith.constant 0 : i32
    return %c0_i32, %c0_i32_0 : i32, i32
  }
  func.func @transform_4(%arg0: i32) -> (i32, i32) {
    %c0_i32 = arith.constant 0 : i32
    %c0_i32_0 = arith.constant 0 : i32
    return %arg0, %c0_i32 : i32, i32
  }
}

</mosaic_0001>

<llo_original>
// kernel: tpu_custom_call.1
$region0: #{tpu_custom_call.1}
  #allocation0 [shape = 'u32[]', space=smem, size = 0x4, offset = 0x4, fixed_abs, tag = 'smem constant byte address 0x4 - core index']
  #allocation1 [shape = 'u32[72,128]{1,0:T(1,128)}', space=vmem, size = 0x9000, scoped, tag = 'internal scratch']
  %s0 = inlined_call_operand.vmem [shape: f32[8,256], index: 0, kind: input, shape index: {}]
  %s1 = inlined_call_operand.vmem [shape: f32[256,8], index: 1, kind: input, shape index: {}]
  %s2 = inlined_call_operand.vmem [shape: f32[8,256], index: 2, kind: input, shape index: {}]
  %s3 = inlined_call_operand.vmem [shape: f32[256,32], index: 3, kind: input, shape index: {}]
  %s4 = inlined_call_operand.hbm [shape: f32[8,32], index: 4, kind: output, shape index: {}]
  %s5 = sld [smem:[#allocation0]]
  $region26: #{tpu_custom_call.1} parent=0
    _
  %s7 = ssub.s32 1, %s5
  %s8 = scalar_select 0, %s7, %s5
  $region1: #{tpu_custom_call.1} parent=0
    #allocation2 [shape = 'u8[4096]{0}', space=vmem, size = 0x1000, scoped, tag = 'output window, operand 0, single buffered']
    #allocation3 [shape = 's32[1]{0}', space=sflag, size = 0x4, scoped, tag = 'scoped memory for tpu_custom_call.1']
    %9 = vsyncpa [#allocation3], 0
    // Predicated region
    $region2: #{tpu_custom_call.1} parent=1 // pred_check
      _
    $region3: #{tpu_custom_call.1} parent=1 // pred_check_branch
      %11 = sbr.rel (0) target = $region5
    $region4: #{tpu_custom_call.1} parent=1 // pred_region
      _
    $region5: #{tpu_custom_call.1} parent=1 // pred_fallthru
      _
    // Predicated region
    $region6: #{tpu_custom_call.1} parent=1 // pred_check
      _
    $region7: #{tpu_custom_call.1} parent=1 // pred_check_branch
      %13 = sbr.rel (0) target = $region9
    $region8: #{tpu_custom_call.1} parent=1 // pred_region
      _
    $region9: #{tpu_custom_call.1} parent=1 // pred_fallthru
      _
    // Predicated region
    $region10: #{tpu_custom_call.1} parent=1 // pred_check
      _
    $region11: #{tpu_custom_call.1} parent=1 // pred_check_branch
      %15 = sbr.rel (0) target = $region13
    $region12: #{tpu_custom_call.1} parent=1 // pred_region
      _
    $region13: #{tpu_custom_call.1} parent=1 // pred_fallthru
      _
    // Predicated region
    $region14: #{tpu_custom_call.1} parent=1 // pred_check
      _
    $region15: #{tpu_custom_call.1} parent=1 // pred_check_branch
      %17 = sbr.rel (0) target = $region17
    $region16: #{tpu_custom_call.1} parent=1 // pred_region
      _
    $region17: #{tpu_custom_call.1} parent=1 // pred_fallthru
      _
    %v18 = vld [vmem:[%s0] sm:$0xff]
    %v19 = vld [vmem:[%s0 + $0x8] sm:$0xff]
    %v20 = vld [vmem:[%s1] sm:$0xff]
    %v21 = vld [vmem:[%s1 + $0x8] sm:$0xff]
    %v22 = vld [vmem:[%s1 + $0x10] sm:$0xff]
    %v23 = vld [vmem:[%s1 + $0x18] sm:$0xff]
    %v24 = vld [vmem:[%s1 + $0x20] sm:$0xff]
    %v25 = vld [vmem:[%s1 + $0x28] sm:$0xff]
    %v26 = vld [vmem:[%s1 + $0x30] sm:$0xff]
    %v27 = vld [vmem:[%s1 + $0x38] sm:$0xff]
    %v28 = vld [vmem:[%s1 + $0x40] sm:$0xff]
    %v29 = vld [vmem:[%s1 + $0x48] sm:$0xff]
    %v30 = vld [vmem:[%s1 + $0x50] sm:$0xff]
    %v31 = vld [vmem:[%s1 + $0x58] sm:$0xff]
    %v32 = vld [vmem:[%s1 + $0x60] sm:$0xff]
    %v33 = vld [vmem:[%s1 + $0x68] sm:$0xff]
    %v34 = vld [vmem:[%s1 + $0x70] sm:$0xff]
    %v35 = vld [vmem:[%s1 + $0x78] sm:$0xff]
    %v36 = vld [vmem:[%s1 + $0x80] sm:$0xff]
    %v37 = vld [vmem:[%s1 + $0x88] sm:$0xff]
    %v38 = vld [vmem:[%s1 + $0x90] sm:$0xff]
    %v39 = vld [vmem:[%s1 + $0x98] sm:$0xff]
    %v40 = vld [vmem:[%s1 + $0xa0] sm:$0xff]
    %v41 = vld [vmem:[%s1 + $0xa8] sm:$0xff]
    %v42 = vld [vmem:[%s1 + $0xb0] sm:$0xff]
    %v43 = vld [vmem:[%s1 + $0xb8] sm:$0xff]
    %v44 = vld [vmem:[%s1 + $0xc0] sm:$0xff]
    %v45 = vld [vmem:[%s1 + $0xc8] sm:$0xff]
    %v46 = vld [vmem:[%s1 + $0xd0] sm:$0xff]
    %v47 = vld [vmem:[%s1 + $0xd8] sm:$0xff]
    %v48 = vld [vmem:[%s1 + $0xe0] sm:$0xff]
    %v49 = vld [vmem:[%s1 + $0xe8] sm:$0xff]
    %v50 = vld [vmem:[%s1 + $0xf0] sm:$0xff]
    %v51 = vld [vmem:[%s1 + $0xf8] sm:$0xff]
    %v52 = vand.u32 %v35, 4294901760
    %53 = vmatpush.msra.mxu0 %v52
    %v54 = vand.u32 %v34, 4294901760
    %55 = vmatpush.msra.mxu0 %v54
    %v56 = vand.u32 %v33, 4294901760
    %57 = vmatpush.msra.mxu0 %v56
    %v58 = vand.u32 %v32, 4294901760
    %59 = vmatpush.msra.mxu0 %v58
    %v60 = vand.u32 %v31, 4294901760
    %61 = vmatpush.msra.mxu0 %v60
    %v62 = vand.u32 %v30, 4294901760
    %63 = vmatpush.msra.mxu0 %v62
    %v64 = vand.u32 %v29, 4294901760
    %65 = vmatpush.msra.mxu0 %v64
    %v66 = vand.u32 %v28, 4294901760
    %67 = vmatpush.msra.mxu0 %v66
    %v68 = vand.u32 %v27, 4294901760
    %69 = vmatpush.msra.mxu0 %v68
    %v70 = vand.u32 %v26, 4294901760
    %71 = vmatpush.msra.mxu0 %v70
    %v72 = vand.u32 %v25, 4294901760
    %73 = vmatpush.msra.mxu0 %v72
    %v74 = vand.u32 %v24, 4294901760
    %75 = vmatpush.msra.mxu0 %v74
    %v76 = vand.u32 %v23, 4294901760
    %77 = vmatpush.msra.mxu0 %v76
    %v78 = vand.u32 %v22, 4294901760
    %79 = vmatpush.msra.mxu0 %v78
    %v80 = vand.u32 %v21, 4294901760
    %81 = vmatpush.msra.mxu0 %v80
    %v82 = vand.u32 %v20, 4294901760
    %83 = vmatpush.msra.mxu0 %v82
    %v84 = vand.u32 %v18, 4294901760
    %v85 = vsub.f32 %v18, %v84
    %v86 = vand.u32 %v85, 4294901760
    %v87 = vsub.f32 %v85, %v86
    %v88 = vand.u32 %v87, 4294901760
    %89 = vmatmul.f32.gmra.mxu0 %v88
    %v90 = vpop.f32.mrf.mxu0
    %v91 = vadd.f32 0.0, %v90
    %92 = vdwg.mxu0
    %v93 = vand.u32 %v35, 4294901760
    %v94 = vsub.f32 %v35, %v93
    %v95 = vand.u32 %v94, 4294901760
    %v96 = vsub.f32 %v94, %v95
    %v97 = vand.u32 %v96, 4294901760
    %98 = vmatpush.msra.mxu0 %v97
    %v99 = vand.u32 %v34, 4294901760
    %v100 = vsub.f32 %v34, %v99
    %v101 = vand.u32 %v100, 4294901760
    %v102 = vsub.f32 %v100, %v101
    %v103 = vand.u32 %v102, 4294901760
    %104 = vmatpush.msra.mxu0 %v103
    %v105 = vand.u32 %v33, 4294901760
    %v106 = vsub.f32 %v33, %v105
    %v107 = vand.u32 %v106, 4294901760
    %v108 = vsub.f32 %v106, %v107
    %v109 = vand.u32 %v108, 4294901760
    %110 = vmatpush.msra.mxu0 %v109
    %v111 = vand.u32 %v32, 4294901760
    %v112 = vsub.f32 %v32, %v111
    %v113 = vand.u32 %v112, 4294901760
    %v114 = vsub.f32 %v112, %v113
    %v115 = vand.u32 %v114, 4294901760
    %116 = vmatpush.msra.mxu0 %v115
    %v117 = vand.u32 %v31, 4294901760
    %v118 = vsub.f32 %v31, %v117
    %v119 = vand.u32 %v118, 4294901760
    %v120 = vsub.f32 %v118, %v119
    %v121 = vand.u32 %v120, 4294901760
    %122 = vmatpush.msra.mxu0 %v121
    %v123 = vand.u32 %v30, 4294901760
    %v124 = vsub.f32 %v30, %v123
    %v125 = vand.u32 %v124, 4294901760
    %v126 = vsub.f32 %v124, %v125
    %v127 = vand.u32 %v126, 4294901760
    %128 = vmatpush.msra.mxu0 %v127
    %v129 = vand.u32 %v29, 4294901760
    %v130 = vsub.f32 %v29, %v129
    %v131 = vand.u32 %v130, 4294901760
    %v132 = vsub.f32 %v130, %v131
    %v133 = vand.u32 %v132, 4294901760
    %134 = vmatpush.msra.mxu0 %v133
    %v135 = vand.u32 %v28, 4294901760
    %v136 = vsub.f32 %v28, %v135
    %v137 = vand.u32 %v136, 4294901760
    %v138 = vsub.f32 %v136, %v137
    %v139 = vand.u32 %v138, 4294901760
    %140 = vmatpush.msra.mxu0 %v139
    %v141 = vand.u32 %v27, 4294901760
    %v142 = vsub.f32 %v27, %v141
    %v143 = vand.u32 %v142, 4294901760
    %v144 = vsub.f32 %v142, %v143
    %v145 = vand.u32 %v144, 4294901760
    %146 = vmatpush.msra.mxu0 %v145
    %v147 = vand.u32 %v26, 4294901760
    %v148 = vsub.f32 %v26, %v147
    %v149 = vand.u32 %v148, 4294901760
    %v150 = vsub.f32 %v148, %v149
    %v151 = vand.u32 %v150, 4294901760
    %152 = vmatpush.msra.mxu0 %v151
    %v153 = vand.u32 %v25, 4294901760
    %v154 = vsub.f32 %v25, %v153
    %v155 = vand.u32 %v154, 4294901760
    %v156 = vsub.f32 %v154, %v155
    %v157 = vand.u32 %v156, 4294901760
    %158 = vmatpush.msra.mxu0 %v157
    %v159 = vand.u32 %v24, 4294901760
    %v160 = vsub.f32 %v24, %v159
    %v161 = vand.u32 %v160, 4294901760
    %v162 = vsub.f32 %v160, %v161
    %v163 = vand.u32 %v162, 4294901760
    %164 = vmatpush.msra.mxu0 %v163
    %v165 = vand.u32 %v23, 4294901760
    %v166 = vsub.f32 %v23, %v165
    %v167 = vand.u32 %v166, 4294901760
    %v168 = vsub.f32 %v166, %v167
    %v169 = vand.u32 %v168, 4294901760
    %170 = vmatpush.msra.mxu0 %v169
    %v171 = vand.u32 %v22, 4294901760
    %v172 = vsub.f32 %v22, %v171
    %v173 = vand.u32 %v172, 4294901760
    %v174 = vsub.f32 %v172, %v173
    %v175 = vand.u32 %v174, 4294901760
    %176 = vmatpush.msra.mxu0 %v175
    %v177 = vand.u32 %v21, 4294901760
    %v178 = vsub.f32 %v21, %v177
    %v179 = vand.u32 %v178, 4294901760
    %v180 = vsub.f32 %v178, %v179
    %v181 = vand.u32 %v180, 4294901760
    %182 = vmatpush.msra.mxu0 %v181
    %v183 = vand.u32 %v20, 4294901760
    %v184 = vsub.f32 %v20, %v183
    %v185 = vand.u32 %v184, 4294901760
    %v186 = vsub.f32 %v184, %v185
    %v187 = vand.u32 %v186, 4294901760
    %188 = vmatpush.msra.mxu0 %v187
    %v189 = vand.u32 %v18, 4294901760
    %190 = vmatmul.f32.gmra.mxu0 %v189
    %v191 = vpop.f32.mrf.mxu0
    %v192 = vadd.f32 %v91, %v191
    %193 = vdwg.mxu0
    %v194 = vand.u32 %v35, 4294901760
    %v195 = vsub.f32 %v35, %v194
    %196 = vmatpush.msra.mxu0 %v195
    %v197 = vand.u32 %v34, 4294901760
    %v198 = vsub.f32 %v34, %v197
    %199 = vmatpush.msra.mxu0 %v198
    %v200 = vand.u32 %v33, 4294901760
    %v201 = vsub.f32 %v33, %v200
    %202 = vmatpush.msra.mxu0 %v201
    %v203 = vand.u32 %v32, 4294901760
    %v204 = vsub.f32 %v32, %v203
    %205 = vmatpush.msra.mxu0 %v204
    %v206 = vand.u32 %v31, 4294901760
    %v207 = vsub.f32 %v31, %v206
    %208 = vmatpush.msra.mxu0 %v207
    %v209 = vand.u32 %v30, 4294901760
    %v210 = vsub.f32 %v30, %v209
    %211 = vmatpush.msra.mxu0 %v210
    %v212 = vand.u32 %v29, 4294901760
    %v213 = vsub.f32 %v29, %v212
    %214 = vmatpush.msra.mxu0 %v213
    %v215 = vand.u32 %v28, 4294901760
    %v216 = vsub.f32 %v28, %v215
    %217 = vmatpush.msra.mxu0 %v216
    %v218 = vand.u32 %v27, 4294901760
    %v219 = vsub.f32 %v27, %v218
    %220 = vmatpush.msra.mxu0 %v219
    %v221 = vand.u32 %v26, 4294901760
    %v222 = vsub.f32 %v26, %v221
    %223 = vmatpush.msra.mxu0 %v222
    %v224 = vand.u32 %v25, 4294901760
    %v225 = vsub.f32 %v25, %v224
    %226 = vmatpush.msra.mxu0 %v225
    %v227 = vand.u32 %v24, 4294901760
    %v228 = vsub.f32 %v24, %v227
    %229 = vmatpush.msra.mxu0 %v228
    %v230 = vand.u32 %v23, 4294901760
    %v231 = vsub.f32 %v23, %v230
    %232 = vmatpush.msra.mxu0 %v231
    %v233 = vand.u32 %v22, 4294901760
    %v234 = vsub.f32 %v22, %v233
    %235 = vmatpush.msra.mxu0 %v234
    %v236 = vand.u32 %v21, 4294901760
    %v237 = vsub.f32 %v21, %v236
    %238 = vmatpush.msra.mxu0 %v237
    %v239 = vand.u32 %v20, 4294901760
    %v240 = vsub.f32 %v20, %v239
    %241 = vmatpush.msra.mxu0 %v240
    %v242 = vand.u32 %v18, 4294901760
    %v243 = vsub.f32 %v18, %v242
    %244 = vmatmul.f32.gmra.mxu0 %v243
    %v245 = vpop.f32.mrf.mxu0
    %v246 = vadd.f32 %v192, %v245
    %247 = vdwg.mxu0
    %v248 = vand.u32 %v35, 4294901760
    %249 = vmatpush.msra.mxu0 %v248
    %v250 = vand.u32 %v34, 4294901760
    %251 = vmatpush.msra.mxu0 %v250
    %v252 = vand.u32 %v33, 4294901760
    %253 = vmatpush.msra.mxu0 %v252
    %v254 = vand.u32 %v32, 4294901760
    %255 = vmatpush.msra.mxu0 %v254
    %v256 = vand.u32 %v31, 4294901760
    %257 = vmatpush.msra.mxu0 %v256
    %v258 = vand.u32 %v30, 4294901760
    %259 = vmatpush.msra.mxu0 %v258
    %v260 = vand.u32 %v29, 4294901760
    %261 = vmatpush.msra.mxu0 %v260
    %v262 = vand.u32 %v28, 4294901760
    %263 = vmatpush.msra.mxu0 %v262
    %v264 = vand.u32 %v27, 4294901760
    %265 = vmatpush.msra.mxu0 %v264
    %v266 = vand.u32 %v26, 4294901760
    %267 = vmatpush.msra.mxu0 %v266
    %v268 = vand.u32 %v25, 4294901760
    %269 = vmatpush.msra.mxu0 %v268
    %v270 = vand.u32 %v24, 4294901760
    %271 = vmatpush.msra.mxu0 %v270
    %v272 = vand.u32 %v23, 4294901760
    %273 = vmatpush.msra.mxu0 %v272
    %v274 = vand.u32 %v22, 4294901760
    %275 = vmatpush.msra.mxu0 %v274
    %v276 = vand.u32 %v21, 4294901760
    %277 = vmatpush.msra.mxu0 %v276
    %v278 = vand.u32 %v20, 4294901760
    %279 = vmatpush.msra.mxu0 %v278
    %v280 = vand.u32 %v18, 4294901760
    %v281 = vsub.f32 %v18, %v280
    %v282 = vand.u32 %v281, 4294901760
    %283 = vmatmul.f32.gmra.mxu0 %v282
    %v284 = vpop.f32.mrf.mxu0
    %v285 = vadd.f32 %v246, %v284
    %286 = vdwg.mxu0
    %v287 = vand.u32 %v35, 4294901760
    %v288 = vsub.f32 %v35, %v287
    %v289 = vand.u32 %v288, 4294901760
    %290 = vmatpush.msra.mxu0 %v289
    %v291 = vand.u32 %v34, 4294901760
    %v292 = vsub.f32 %v34, %v291
    %v293 = vand.u32 %v292, 4294901760
    %294 = vmatpush.msra.mxu0 %v293
    %v295 = vand.u32 %v33, 4294901760
    %v296 = vsub.f32 %v33, %v295
    %v297 = vand.u32 %v296, 4294901760
    %298 = vmatpush.msra.mxu0 %v297
    %v299 = vand.u32 %v32, 4294901760
    %v300 = vsub.f32 %v32, %v299
    %v301 = vand.u32 %v300, 4294901760
    %302 = vmatpush.msra.mxu0 %v301
    %v303 = vand.u32 %v31, 4294901760
    %v304 = vsub.f32 %v31, %v303
    %v305 = vand.u32 %v304, 4294901760
    %306 = vmatpush.msra.mxu0 %v305
    %v307 = vand.u32 %v30, 4294901760
    %v308 = vsub.f32 %v30, %v307
    %v309 = vand.u32 %v308, 4294901760
    %310 = vmatpush.msra.mxu0 %v309
    %v311 = vand.u32 %v29, 4294901760
    %v312 = vsub.f32 %v29, %v311
    %v313 = vand.u32 %v312, 4294901760
    %314 = vmatpush.msra.mxu0 %v313
    %v315 = vand.u32 %v28, 4294901760
    %v316 = vsub.f32 %v28, %v315
    %v317 = vand.u32 %v316, 4294901760
    %318 = vmatpush.msra.mxu0 %v317
    %v319 = vand.u32 %v27, 4294901760
    %v320 = vsub.f32 %v27, %v319
    %v321 = vand.u32 %v320, 4294901760
    %322 = vmatpush.msra.mxu0 %v321
    %v323 = vand.u32 %v26, 4294901760
    %v324 = vsub.f32 %v26, %v323
    %v325 = vand.u32 %v324, 4294901760
    %326 = vmatpush.msra.mxu0 %v325
    %v327 = vand.u32 %v25, 4294901760
    %v328 = vsub.f32 %v25, %v327
    %v329 = vand.u32 %v328, 4294901760
    %330 = vmatpush.msra.mxu0 %v329
    %v331 = vand.u32 %v24, 4294901760
    %v332 = vsub.f32 %v24, %v331
    %v333 = vand.u32 %v332, 4294901760
    %334 = vmatpush.msra.mxu0 %v333
    %v335 = vand.u32 %v23, 4294901760
    %v336 = vsub.f32 %v23, %v335
    %v337 = vand.u32 %v336, 4294901760
    %338 = vmatpush.msra.mxu0 %v337
    %v339 = vand.u32 %v22, 4294901760
    %v340 = vsub.f32 %v22, %v339
    %v341 = vand.u32 %v340, 4294901760
    %342 = vmatpush.msra.mxu0 %v341
    %v343 = vand.u32 %v21, 4294901760
    %v344 = vsub.f32 %v21, %v343
    %v345 = vand.u32 %v344, 4294901760
    %346 = vmatpush.msra.mxu0 %v345
    %v347 = vand.u32 %v20, 4294901760
    %v348 = vsub.f32 %v20, %v347
    %v349 = vand.u32 %v348, 4294901760
    %350 = vmatpush.msra.mxu0 %v349
    %v351 = vand.u32 %v18, 4294901760
    %352 = vmatmul.f32.gmra.mxu0 %v351
    %v353 = vpop.f32.mrf.mxu0
    %v354 = vadd.f32 %v285, %v353
    %355 = vdwg.mxu0
    %v356 = vand.u32 %v35, 4294901760
    %357 = vmatpush.msra.mxu0 %v356
    %v358 = vand.u32 %v34, 4294901760
    %359 = vmatpush.msra.mxu0 %v358
    %v360 = vand.u32 %v33, 4294901760
    %361 = vmatpush.msra.mxu0 %v360
    %v362 = vand.u32 %v32, 4294901760
    %363 = vmatpush.msra.mxu0 %v362
    %v364 = vand.u32 %v31, 4294901760
    %365 = vmatpush.msra.mxu0 %v364
    %v366 = vand.u32 %v30, 4294901760
    %367 = vmatpush.msra.mxu0 %v366
    %v368 = vand.u32 %v29, 4294901760
    %369 = vmatpush.msra.mxu0 %v368
    %v370 = vand.u32 %v28, 4294901760
    %371 = vmatpush.msra.mxu0 %v370
    %v372 = vand.u32 %v27, 4294901760
    %373 = vmatpush.msra.mxu0 %v372
    %v374 = vand.u32 %v26, 4294901760
    %375 = vmatpush.msra.mxu0 %v374
    %v376 = vand.u32 %v25, 4294901760
    %377 = vmatpush.msra.mxu0 %v376
    %v378 = vand.u32 %v24, 4294901760
    %379 = vmatpush.msra.mxu0 %v378
    %v380 = vand.u32 %v23, 4294901760
    %381 = vmatpush.msra.mxu0 %v380
    %v382 = vand.u32 %v22, 4294901760
    %383 = vmatpush.msra.mxu0 %v382
    %v384 = vand.u32 %v21, 4294901760
    %385 = vmatpush.msra.mxu0 %v384
    %v386 = vand.u32 %v20, 4294901760
    %387 = vmatpush.msra.mxu0 %v386
    %v388 = vand.u32 %v18, 4294901760
    %389 = vmatmul.f32.gmra.mxu0 %v388
    %v390 = vpop.f32.mrf.mxu0
    %v391 = vadd.f32 %v354, %v390
    %392 = vdwg.mxu0
    %v393 = vand.u32 %v51, 4294901760
    %394 = vmatpush.msra.mxu0 %v393
    %v395 = vand.u32 %v50, 4294901760
    %396 = vmatpush.msra.mxu0 %v395
    %v397 = vand.u32 %v49, 4294901760
    %398 = vmatpush.msra.mxu0 %v397
    %v399 = vand.u32 %v48, 4294901760
    %400 = vmatpush.msra.mxu0 %v399
    %v401 = vand.u32 %v47, 4294901760
    %402 = vmatpush.msra.mxu0 %v401
    %v403 = vand.u32 %v46, 4294901760
    %404 = vmatpush.msra.mxu0 %v403
    %v405 = vand.u32 %v45, 4294901760
    %406 = vmatpush.msra.mxu0 %v405
    %v407 = vand.u32 %v44, 4294901760
    %408 = vmatpush.msra.mxu0 %v407
    %v409 = vand.u32 %v43, 4294901760
    %410 = vmatpush.msra.mxu0 %v409
    %v411 = vand.u32 %v42, 4294901760
    %412 = vmatpush.msra.mxu0 %v411
    %v413 = vand.u32 %v41, 4294901760
    %414 = vmatpush.msra.mxu0 %v413
    %v415 = vand.u32 %v40, 4294901760
    %416 = vmatpush.msra.mxu0 %v415
    %v417 = vand.u32 %v39, 4294901760
    %418 = vmatpush.msra.mxu0 %v417
    %v419 = vand.u32 %v38, 4294901760
    %420 = vmatpush.msra.mxu0 %v419
    %v421 = vand.u32 %v37, 4294901760
    %422 = vmatpush.msra.mxu0 %v421
    %v423 = vand.u32 %v36, 4294901760
    %424 = vmatpush.msra.mxu0 %v423
    %v425 = vand.u32 %v19, 4294901760
    %v426 = vsub.f32 %v19, %v425
    %v427 = vand.u32 %v426, 4294901760
    %v428 = vsub.f32 %v426, %v427
    %v429 = vand.u32 %v428, 4294901760
    %430 = vmatmul.f32.gmra.mxu0 %v429
    %v431 = vpop.f32.mrf.mxu0
    %v432 = vadd.f32 %v391, %v431
    %433 = vdwg.mxu0
    %v434 = vand.u32 %v51, 4294901760
    %v435 = vsub.f32 %v51, %v434
    %v436 = vand.u32 %v435, 4294901760
    %v437 = vsub.f32 %v435, %v436
    %v438 = vand.u32 %v437, 4294901760
    %439 = vmatpush.msra.mxu0 %v438
    %v440 = vand.u32 %v50, 4294901760
    %v441 = vsub.f32 %v50, %v440
    %v442 = vand.u32 %v441, 4294901760
    %v443 = vsub.f32 %v441, %v442
    %v444 = vand.u32 %v443, 4294901760
    %445 = vmatpush.msra.mxu0 %v444
    %v446 = vand.u32 %v49, 4294901760
    %v447 = vsub.f32 %v49, %v446
    %v448 = vand.u32 %v447, 4294901760
    %v449 = vsub.f32 %v447, %v448
    %v450 = vand.u32 %v449, 4294901760
    %451 = vmatpush.msra.mxu0 %v450
    %v452 = vand.u32 %v48, 4294901760
    %v453 = vsub.f32 %v48, %v452
    %v454 = vand.u32 %v453, 4294901760
    %v455 = vsub.f32 %v453, %v454
    %v456 = vand.u32 %v455, 4294901760
    %457 = vmatpush.msra.mxu0 %v456
    %v458 = vand.u32 %v47, 4294901760
    %v459 = vsub.f32 %v47, %v458
    %v460 = vand.u32 %v459, 4294901760
    %v461 = vsub.f32 %v459, %v460
    %v462 = vand.u32 %v461, 4294901760
    %463 = vmatpush.msra.mxu0 %v462
    %v464 = vand.u32 %v46, 4294901760
    %v465 = vsub.f32 %v46, %v464
    %v466 = vand.u32 %v465, 4294901760
    %v467 = vsub.f32 %v465, %v466
    %v468 = vand.u32 %v467, 4294901760
    %469 = vmatpush.msra.mxu0 %v468
    %v470 = vand.u32 %v45, 4294901760
    %v471 = vsub.f32 %v45, %v470
    %v472 = vand.u32 %v471, 4294901760
    %v473 = vsub.f32 %v471, %v472
    %v474 = vand.u32 %v473, 4294901760
    %475 = vmatpush.msra.mxu0 %v474
    %v476 = vand.u32 %v44, 4294901760
    %v477 = vsub.f32 %v44, %v476
    %v478 = vand.u32 %v477, 4294901760
    %v479 = vsub.f32 %v477, %v478
    %v480 = vand.u32 %v479, 4294901760
    %481 = vmatpush.msra.mxu0 %v480
    %v482 = vand.u32 %v43, 4294901760
    %v483 = vsub.f32 %v43, %v482
    %v484 = vand.u32 %v483, 4294901760
    %v485 = vsub.f32 %v483, %v484
    %v486 = vand.u32 %v485, 4294901760
    %487 = vmatpush.msra.mxu0 %v486
    %v488 = vand.u32 %v42, 4294901760
    %v489 = vsub.f32 %v42, %v488
    %v490 = vand.u32 %v489, 4294901760
    %v491 = vsub.f32 %v489, %v490
    %v492 = vand.u32 %v491, 4294901760
    %493 = vmatpush.msra.mxu0 %v492
    %v494 = vand.u32 %v41, 4294901760
    %v495 = vsub.f32 %v41, %v494
    %v496 = vand.u32 %v495, 4294901760
    %v497 = vsub.f32 %v495, %v496
    %v498 = vand.u32 %v497, 4294901760
    %499 = vmatpush.msra.mxu0 %v498
    %v500 = vand.u32 %v40, 4294901760
    %v501 = vsub.f32 %v40, %v500
    %v502 = vand.u32 %v501, 4294901760
    %v503 = vsub.f32 %v501, %v502
    %v504 = vand.u32 %v503, 4294901760
    %505 = vmatpush.msra.mxu0 %v504
    %v506 = vand.u32 %v39, 4294901760
    %v507 = vsub.f32 %v39, %v506
    %v508 = vand.u32 %v507, 4294901760
    %v509 = vsub.f32 %v507, %v508
    %v510 = vand.u32 %v509, 4294901760
    %511 = vmatpush.msra.mxu0 %v510
    %v512 = vand.u32 %v38, 4294901760
    %v513 = vsub.f32 %v38, %v512
    %v514 = vand.u32 %v513, 4294901760
    %v515 = vsub.f32 %v513, %v514
    %v516 = vand.u32 %v515, 4294901760
    %517 = vmatpush.msra.mxu0 %v516
    %v518 = vand.u32 %v37, 4294901760
    %v519 = vsub.f32 %v37, %v518
    %v520 = vand.u32 %v519, 4294901760
    %v521 = vsub.f32 %v519, %v520
    %v522 = vand.u32 %v521, 4294901760
    %523 = vmatpush.msra.mxu0 %v522
    %v524 = vand.u32 %v36, 4294901760
    %v525 = vsub.f32 %v36, %v524
    %v526 = vand.u32 %v525, 4294901760
    %v527 = vsub.f32 %v525, %v526
    %v528 = vand.u32 %v527, 4294901760
    %529 = vmatpush.msra.mxu0 %v528
    %v530 = vand.u32 %v19, 4294901760
    %531 = vmatmul.f32.gmra.mxu0 %v530
    %v532 = vpop.f32.mrf.mxu0
    %v533 = vadd.f32 %v432, %v532
    %534 = vdwg.mxu0
    %v535 = vand.u32 %v51, 4294901760
    %v536 = vsub.f32 %v51, %v535
    %537 = vmatpush.msra.mxu0 %v536
    %v538 = vand.u32 %v50, 4294901760
    %v539 = vsub.f32 %v50, %v538
    %540 = vmatpush.msra.mxu0 %v539
    %v541 = vand.u32 %v49, 4294901760
    %v542 = vsub.f32 %v49, %v541
    %543 = vmatpush.msra.mxu0 %v542
    %v544 = vand.u32 %v48, 4294901760
    %v545 = vsub.f32 %v48, %v544
    %546 = vmatpush.msra.mxu0 %v545
    %v547 = vand.u32 %v47, 4294901760
    %v548 = vsub.f32 %v47, %v547
    %549 = vmatpush.msra.mxu0 %v548
    %v550 = vand.u32 %v46, 4294901760
    %v551 = vsub.f32 %v46, %v550
    %552 = vmatpush.msra.mxu0 %v551
    %v553 = vand.u32 %v45, 4294901760
    %v554 = vsub.f32 %v45, %v553
    %555 = vmatpush.msra.mxu0 %v554
    %v556 = vand.u32 %v44, 4294901760
    %v557 = vsub.f32 %v44, %v556
    %558 = vmatpush.msra.mxu0 %v557
    %v559 = vand.u32 %v43, 4294901760
    %v560 = vsub.f32 %v43, %v559
    %561 = vmatpush.msra.mxu0 %v560
    %v562 = vand.u32 %v42, 4294901760
    %v563 = vsub.f32 %v42, %v562
    %564 = vmatpush.msra.mxu0 %v563
    %v565 = vand.u32 %v41, 4294901760
    %v566 = vsub.f32 %v41, %v565
    %567 = vmatpush.msra.mxu0 %v566
    %v568 = vand.u32 %v40, 4294901760
    %v569 = vsub.f32 %v40, %v568
    %570 = vmatpush.msra.mxu0 %v569
    %v571 = vand.u32 %v39, 4294901760
    %v572 = vsub.f32 %v39, %v571
    %573 = vmatpush.msra.mxu0 %v572
    %v574 = vand.u32 %v38, 4294901760
    %v575 = vsub.f32 %v38, %v574
    %576 = vmatpush.msra.mxu0 %v575
    %v577 = vand.u32 %v37, 4294901760
    %v578 = vsub.f32 %v37, %v577
    %579 = vmatpush.msra.mxu0 %v578
    %v580 = vand.u32 %v36, 4294901760
    %v581 = vsub.f32 %v36, %v580
    %582 = vmatpush.msra.mxu0 %v581
    %v583 = vand.u32 %v19, 4294901760
    %v584 = vsub.f32 %v19, %v583
    %585 = vmatmul.f32.gmra.mxu0 %v584
    %v586 = vpop.f32.mrf.mxu0
    %v587 = vadd.f32 %v533, %v586
    %588 = vdwg.mxu0
    %v589 = vand.u32 %v51, 4294901760
    %590 = vmatpush.msra.mxu0 %v589
    %v591 = vand.u32 %v50, 4294901760
    %592 = vmatpush.msra.mxu0 %v591
    %v593 = vand.u32 %v49, 4294901760
    %594 = vmatpush.msra.mxu0 %v593
    %v595 = vand.u32 %v48, 4294901760
    %596 = vmatpush.msra.mxu0 %v595
    %v597 = vand.u32 %v47, 4294901760
    %598 = vmatpush.msra.mxu0 %v597
    %v599 = vand.u32 %v46, 4294901760
    %600 = vmatpush.msra.mxu0 %v599
    %v601 = vand.u32 %v45, 4294901760
    %602 = vmatpush.msra.mxu0 %v601
    %v603 = vand.u32 %v44, 4294901760
    %604 = vmatpush.msra.mxu0 %v603
    %v605 = vand.u32 %v43, 4294901760
    %606 = vmatpush.msra.mxu0 %v605
    %v607 = vand.u32 %v42, 4294901760
    %608 = vmatpush.msra.mxu0 %v607
    %v609 = vand.u32 %v41, 4294901760
    %610 = vmatpush.msra.mxu0 %v609
    %v611 = vand.u32 %v40, 4294901760
    %612 = vmatpush.msra.mxu0 %v611
    %v613 = vand.u32 %v39, 4294901760
    %614 = vmatpush.msra.mxu0 %v613
    %v615 = vand.u32 %v38, 4294901760
    %616 = vmatpush.msra.mxu0 %v615
    %v617 = vand.u32 %v37, 4294901760
    %618 = vmatpush.msra.mxu0 %v617
    %v619 = vand.u32 %v36, 4294901760
    %620 = vmatpush.msra.mxu0 %v619
    %v621 = vand.u32 %v19, 4294901760
    %v622 = vsub.f32 %v19, %v621
    %v623 = vand.u32 %v622, 4294901760
    %624 = vmatmul.f32.gmra.mxu0 %v623
    %v625 = vpop.f32.mrf.mxu0
    %v626 = vadd.f32 %v587, %v625
    %627 = vdwg.mxu0
    %v628 = vand.u32 %v51, 4294901760
    %v629 = vsub.f32 %v51, %v628
    %v630 = vand.u32 %v629, 4294901760
    %631 = vmatpush.msra.mxu0 %v630
    %v632 = vand.u32 %v50, 4294901760
    %v633 = vsub.f32 %v50, %v632
    %v634 = vand.u32 %v633, 4294901760
    %635 = vmatpush.msra.mxu0 %v634
    %v636 = vand.u32 %v49, 4294901760
    %v637 = vsub.f32 %v49, %v636
    %v638 = vand.u32 %v637, 4294901760
    %639 = vmatpush.msra.mxu0 %v638
    %v640 = vand.u32 %v48, 4294901760
    %v641 = vsub.f32 %v48, %v640
    %v642 = vand.u32 %v641, 4294901760
    %643 = vmatpush.msra.mxu0 %v642
    %v644 = vand.u32 %v47, 4294901760
    %v645 = vsub.f32 %v47, %v644
    %v646 = vand.u32 %v645, 4294901760
    %647 = vmatpush.msra.mxu0 %v646
    %v648 = vand.u32 %v46, 4294901760
    %v649 = vsub.f32 %v46, %v648
    %v650 = vand.u32 %v649, 4294901760
    %651 = vmatpush.msra.mxu0 %v650
    %v652 = vand.u32 %v45, 4294901760
    %v653 = vsub.f32 %v45, %v652
    %v654 = vand.u32 %v653, 4294901760
    %655 = vmatpush.msra.mxu0 %v654
    %v656 = vand.u32 %v44, 4294901760
    %v657 = vsub.f32 %v44, %v656
    %v658 = vand.u32 %v657, 4294901760
    %659 = vmatpush.msra.mxu0 %v658
    %v660 = vand.u32 %v43, 4294901760
    %v661 = vsub.f32 %v43, %v660
    %v662 = vand.u32 %v661, 4294901760
    %663 = vmatpush.msra.mxu0 %v662
    %v664 = vand.u32 %v42, 4294901760
    %v665 = vsub.f32 %v42, %v664
    %v666 = vand.u32 %v665, 4294901760
    %667 = vmatpush.msra.mxu0 %v666
    %v668 = vand.u32 %v41, 4294901760
    %v669 = vsub.f32 %v41, %v668
    %v670 = vand.u32 %v669, 4294901760
    %671 = vmatpush.msra.mxu0 %v670
    %v672 = vand.u32 %v40, 4294901760
    %v673 = vsub.f32 %v40, %v672
    %v674 = vand.u32 %v673, 4294901760
    %675 = vmatpush.msra.mxu0 %v674
    %v676 = vand.u32 %v39, 4294901760
    %v677 = vsub.f32 %v39, %v676
    %v678 = vand.u32 %v677, 4294901760
    %679 = vmatpush.msra.mxu0 %v678
    %v680 = vand.u32 %v38, 4294901760
    %v681 = vsub.f32 %v38, %v680
    %v682 = vand.u32 %v681, 4294901760
    %683 = vmatpush.msra.mxu0 %v682
    %v684 = vand.u32 %v37, 4294901760
    %v685 = vsub.f32 %v37, %v684
    %v686 = vand.u32 %v685, 4294901760
    %687 = vmatpush.msra.mxu0 %v686
    %v688 = vand.u32 %v36, 4294901760
    %v689 = vsub.f32 %v36, %v688
    %v690 = vand.u32 %v689, 4294901760
    %691 = vmatpush.msra.mxu0 %v690
    %v692 = vand.u32 %v19, 4294901760
    %693 = vmatmul.f32.gmra.mxu0 %v692
    %v694 = vpop.f32.mrf.mxu0
    %v695 = vadd.f32 %v626, %v694
    %696 = vdwg.mxu0
    %v697 = vand.u32 %v51, 4294901760
    %698 = vmatpush.msra.mxu0 %v697
    %v699 = vand.u32 %v50, 4294901760
    %700 = vmatpush.msra.mxu0 %v699
    %v701 = vand.u32 %v49, 4294901760
    %702 = vmatpush.msra.mxu0 %v701
    %v703 = vand.u32 %v48, 4294901760
    %704 = vmatpush.msra.mxu0 %v703
    %v705 = vand.u32 %v47, 4294901760
    %706 = vmatpush.msra.mxu0 %v705
    %v707 = vand.u32 %v46, 4294901760
    %708 = vmatpush.msra.mxu0 %v707
    %v709 = vand.u32 %v45, 4294901760
    %710 = vmatpush.msra.mxu0 %v709
    %v711 = vand.u32 %v44, 4294901760
    %712 = vmatpush.msra.mxu0 %v711
    %v713 = vand.u32 %v43, 4294901760
    %714 = vmatpush.msra.mxu0 %v713
    %v715 = vand.u32 %v42, 4294901760
    %716 = vmatpush.msra.mxu0 %v715
    %v717 = vand.u32 %v41, 4294901760
    %718 = vmatpush.msra.mxu0 %v717
    %v719 = vand.u32 %v40, 4294901760
    %720 = vmatpush.msra.mxu0 %v719
    %v721 = vand.u32 %v39, 4294901760
    %722 = vmatpush.msra.mxu0 %v721
    %v723 = vand.u32 %v38, 4294901760
    %724 = vmatpush.msra.mxu0 %v723
    %v725 = vand.u32 %v37, 4294901760
    %726 = vmatpush.msra.mxu0 %v725
    %v727 = vand.u32 %v36, 4294901760
    %728 = vmatpush.msra.mxu0 %v727
    %v729 = vand.u32 %v19, 4294901760
    %730 = vmatmul.f32.gmra.mxu0 %v729
    %v731 = vpop.f32.mrf.mxu0
    %v732 = vadd.f32 %v695, %v731
    %733 = vdwg.mxu0
    %vm734 = vcmask 64512
    %v735 = vsel %vm734, %v732, -inf
    %736 = vmax.xlane.f32.xlu0 %v735
    %v737 = vpop.xlane.xlu0 %736
    %v738 = vsub.f32 %v732, %v737
    %v739 = vmul.f32 %v738, 1.442695
    %v740 = vpow.pop %v739
    %v741 = vsel %vm734, %v740, 0.0
    %742 = vadd.xlane.f32.xlu0 %v741
    %v743 = vpop.xlane.xlu0 %742
    %v744 = vrcp.pop %v743
    %v745 = vmul.f32 %v743, %v744
    %v746 = vsub.f32 1.0, %v745
    %v747 = vmul.f32 %v744, %v746
    %v748 = vadd.f32 %v744, %v747
    %vm749 = vweird.f32 %v743
    %vm750 = vweird.f32 %v744
    %vm751 = vmor %vm749, %vm750
    %v752 = vsel %vm751, %v744, %v748
    %v753 = vand.u32 2147483647, %v743
    %vm754 = vcmp.eq.f32.partialorder %v753, 8.507059e+37
    %v755 = vand.u32 %v743, 2147483648
    %v756 = vor.u32 1.1754944e-38, %v755
    %v757 = vsel %vm754, %v756, %v752
    %v758 = vmul.f32 %v740, %v757
    %v759 = vld [vmem:[%s2] sm:$0xff]
    %v760 = vld [vmem:[%s2 + $0x8] sm:$0xff]
    %v762 = vsel %vm734, %v758, 0
    %764 = vmatpush.msra.mxu0 0.0
    %765 = vmatpush.msra.mxu0 0.0
    %766 = vmatpush.msra.mxu0 0.0
    %767 = vmatpush.msra.mxu0 0.0
    %768 = vmatpush.msra.mxu0 0.0
    %769 = vmatpush.msra.mxu0 0.0
    %770 = vmatpush.msra.mxu0 0.0
    %771 = vmatpush.msra.mxu0 0.0
    %772 = vmatpush.msra.mxu0 0.0
    %773 = vmatpush.msra.mxu0 0.0
    %774 = vmatpush.msra.mxu0 0.0
    %775 = vmatpush.msra.mxu0 0.0
    %776 = vmatpush.msra.mxu0 0.0
    %777 = vmatpush.msra.mxu0 0.0
    %778 = vmatpush.msra.mxu0 0.0
    %v779 = vand.u32 %v759, 4294901760
    %780 = vmatpush.msra.mxu0 %v779
    %v781 = vand.u32 %v762, 4294901760
    %v782 = vsub.f32 %v762, %v781
    %v783 = vand.u32 %v782, 4294901760
    %v784 = vsub.f32 %v782, %v783
    %v785 = vand.u32 %v784, 4294901760
    %786 = vmatmul.f32.gmra.mxu0 %v785
    %v787 = vpop.f32.mrf.mxu0
    %v788 = vadd.f32 0.0, %v787
    %789 = vdwg.mxu0
    %790 = vmatpush.msra.mxu0 0.0
    %791 = vmatpush.msra.mxu0 0.0
    %792 = vmatpush.msra.mxu0 0.0
    %793 = vmatpush.msra.mxu0 0.0
    %794 = vmatpush.msra.mxu0 0.0
    %795 = vmatpush.msra.mxu0 0.0
    %796 = vmatpush.msra.mxu0 0.0
    %797 = vmatpush.msra.mxu0 0.0
    %798 = vmatpush.msra.mxu0 0.0
    %799 = vmatpush.msra.mxu0 0.0
    %800 = vmatpush.msra.mxu0 0.0
    %801 = vmatpush.msra.mxu0 0.0
    %802 = vmatpush.msra.mxu0 0.0
    %803 = vmatpush.msra.mxu0 0.0
    %804 = vmatpush.msra.mxu0 0.0
    %v805 = vand.u32 %v759, 4294901760
    %v806 = vsub.f32 %v759, %v805
    %v807 = vand.u32 %v806, 4294901760
    %v808 = vsub.f32 %v806, %v807
    %v809 = vand.u32 %v808, 4294901760
    %810 = vmatpush.msra.mxu0 %v809
    %v811 = vand.u32 %v762, 4294901760
    %812 = vmatmul.f32.gmra.mxu0 %v811
    %v813 = vpop.f32.mrf.mxu0
    %v814 = vadd.f32 %v788, %v813
    %815 = vdwg.mxu0
    %816 = vmatpush.msra.mxu0 0.0
    %817 = vmatpush.msra.mxu0 0.0
    %818 = vmatpush.msra.mxu0 0.0
    %819 = vmatpush.msra.mxu0 0.0
    %820 = vmatpush.msra.mxu0 0.0
    %821 = vmatpush.msra.mxu0 0.0
    %822 = vmatpush.msra.mxu0 0.0
    %823 = vmatpush.msra.mxu0 0.0
    %824 = vmatpush.msra.mxu0 0.0
    %825 = vmatpush.msra.mxu0 0.0
    %826 = vmatpush.msra.mxu0 0.0
    %827 = vmatpush.msra.mxu0 0.0
    %828 = vmatpush.msra.mxu0 0.0
    %829 = vmatpush.msra.mxu0 0.0
    %830 = vmatpush.msra.mxu0 0.0
    %v831 = vand.u32 %v759, 4294901760
    %v832 = vsub.f32 %v759, %v831
    %833 = vmatpush.msra.mxu0 %v832
    %v834 = vand.u32 %v762, 4294901760
    %v835 = vsub.f32 %v762, %v834
    %836 = vmatmul.f32.gmra.mxu0 %v835
    %v837 = vpop.f32.mrf.mxu0
    %v838 = vadd.f32 %v814, %v837
    %839 = vdwg.mxu0
    %840 = vmatpush.msra.mxu0 0.0
    %841 = vmatpush.msra.mxu0 0.0
    %842 = vmatpush.msra.mxu0 0.0
    %843 = vmatpush.msra.mxu0 0.0
    %844 = vmatpush.msra.mxu0 0.0
    %845 = vmatpush.msra.mxu0 0.0
    %846 = vmatpush.msra.mxu0 0.0
    %847 = vmatpush.msra.mxu0 0.0
    %848 = vmatpush.msra.mxu0 0.0
    %849 = vmatpush.msra.mxu0 0.0
    %850 = vmatpush.msra.mxu0 0.0
    %851 = vmatpush.msra.mxu0 0.0
    %852 = vmatpush.msra.mxu0 0.0
    %853 = vmatpush.msra.mxu0 0.0
    %854 = vmatpush.msra.mxu0 0.0
    %v855 = vand.u32 %v759, 4294901760
    %856 = vmatpush.msra.mxu0 %v855
    %v857 = vand.u32 %v762, 4294901760
    %v858 = vsub.f32 %v762, %v857
    %v859 = vand.u32 %v858, 4294901760
    %860 = vmatmul.f32.gmra.mxu0 %v859
    %v861 = vpop.f32.mrf.mxu0
    %v862 = vadd.f32 %v838, %v861
    %863 = vdwg.mxu0
    %864 = vmatpush.msra.mxu0 0.0
    %865 = vmatpush.msra.mxu0 0.0
    %866 = vmatpush.msra.mxu0 0.0
    %867 = vmatpush.msra.mxu0 0.0
    %868 = vmatpush.msra.mxu0 0.0
    %869 = vmatpush.msra.mxu0 0.0
    %870 = vmatpush.msra.mxu0 0.0
    %871 = vmatpush.msra.mxu0 0.0
    %872 = vmatpush.msra.mxu0 0.0
    %873 = vmatpush.msra.mxu0 0.0
    %874 = vmatpush.msra.mxu0 0.0
    %875 = vmatpush.msra.mxu0 0.0
    %876 = vmatpush.msra.mxu0 0.0
    %877 = vmatpush.msra.mxu0 0.0
    %878 = vmatpush.msra.mxu0 0.0
    %v879 = vand.u32 %v759, 4294901760
    %v880 = vsub.f32 %v759, %v879
    %v881 = vand.u32 %v880, 4294901760
    %882 = vmatpush.msra.mxu0 %v881
    %v883 = vand.u32 %v762, 4294901760
    %884 = vmatmul.f32.gmra.mxu0 %v883
    %v885 = vpop.f32.mrf.mxu0
    %v886 = vadd.f32 %v862, %v885
    %887 = vdwg.mxu0
    %888 = vmatpush.msra.mxu0 0.0
    %889 = vmatpush.msra.mxu0 0.0
    %890 = vmatpush.msra.mxu0 0.0
    %891 = vmatpush.msra.mxu0 0.0
    %892 = vmatpush.msra.mxu0 0.0
    %893 = vmatpush.msra.mxu0 0.0
    %894 = vmatpush.msra.mxu0 0.0
    %895 = vmatpush.msra.mxu0 0.0
    %896 = vmatpush.msra.mxu0 0.0
    %897 = vmatpush.msra.mxu0 0.0
    %898 = vmatpush.msra.mxu0 0.0
    %899 = vmatpush.msra.mxu0 0.0
    %900 = vmatpush.msra.mxu0 0.0
    %901 = vmatpush.msra.mxu0 0.0
    %902 = vmatpush.msra.mxu0 0.0
    %v903 = vand.u32 %v759, 4294901760
    %904 = vmatpush.msra.mxu0 %v903
    %v905 = vand.u32 %v762, 4294901760
    %906 = vmatmul.f32.gmra.mxu0 %v905
    %v907 = vpop.f32.mrf.mxu0
    %v908 = vadd.f32 %v886, %v907
    %909 = vdwg.mxu0
    %910 = vmatpush.msra.mxu0 0.0
    %911 = vmatpush.msra.mxu0 0.0
    %912 = vmatpush.msra.mxu0 0.0
    %913 = vmatpush.msra.mxu0 0.0
    %914 = vmatpush.msra.mxu0 0.0
    %915 = vmatpush.msra.mxu0 0.0
    %916 = vmatpush.msra.mxu0 0.0
    %917 = vmatpush.msra.mxu0 0.0
    %918 = vmatpush.msra.mxu0 0.0
    %919 = vmatpush.msra.mxu0 0.0
    %920 = vmatpush.msra.mxu0 0.0
    %921 = vmatpush.msra.mxu0 0.0
    %922 = vmatpush.msra.mxu0 0.0
    %923 = vmatpush.msra.mxu0 0.0
    %924 = vmatpush.msra.mxu0 0.0
    %v925 = vand.u32 %v760, 4294901760
    %926 = vmatpush.msra.mxu0 %v925
    %v927 = vand.u32 %v762, 4294901760
    %v928 = vsub.f32 %v762, %v927
    %v929 = vand.u32 %v928, 4294901760
    %v930 = vsub.f32 %v928, %v929
    %v931 = vand.u32 %v930, 4294901760
    %932 = vmatmul.f32.gmra.mxu0 %v931
    %v933 = vpop.f32.mrf.mxu0
    %v934 = vadd.f32 0.0, %v933
    %935 = vdwg.mxu0
    %936 = vmatpush.msra.mxu0 0.0
    %937 = vmatpush.msra.mxu0 0.0
    %938 = vmatpush.msra.mxu0 0.0
    %939 = vmatpush.msra.mxu0 0.0
    %940 = vmatpush.msra.mxu0 0.0
    %941 = vmatpush.msra.mxu0 0.0
    %942 = vmatpush.msra.mxu0 0.0
    %943 = vmatpush.msra.mxu0 0.0
    %944 = vmatpush.msra.mxu0 0.0
    %945 = vmatpush.msra.mxu0 0.0
    %946 = vmatpush.msra.mxu0 0.0
    %947 = vmatpush.msra.mxu0 0.0
    %948 = vmatpush.msra.mxu0 0.0
    %949 = vmatpush.msra.mxu0 0.0
    %950 = vmatpush.msra.mxu0 0.0
    %v951 = vand.u32 %v760, 4294901760
    %v952 = vsub.f32 %v760, %v951
    %v953 = vand.u32 %v952, 4294901760
    %v954 = vsub.f32 %v952, %v953
    %v955 = vand.u32 %v954, 4294901760
    %956 = vmatpush.msra.mxu0 %v955
    %v957 = vand.u32 %v762, 4294901760
    %958 = vmatmul.f32.gmra.mxu0 %v957
    %v959 = vpop.f32.mrf.mxu0
    %v960 = vadd.f32 %v934, %v959
    %961 = vdwg.mxu0
    %962 = vmatpush.msra.mxu0 0.0
    %963 = vmatpush.msra.mxu0 0.0
    %964 = vmatpush.msra.mxu0 0.0
    %965 = vmatpush.msra.mxu0 0.0
    %966 = vmatpush.msra.mxu0 0.0
    %967 = vmatpush.msra.mxu0 0.0
    %968 = vmatpush.msra.mxu0 0.0
    %969 = vmatpush.msra.mxu0 0.0
    %970 = vmatpush.msra.mxu0 0.0
    %971 = vmatpush.msra.mxu0 0.0
    %972 = vmatpush.msra.mxu0 0.0
    %973 = vmatpush.msra.mxu0 0.0
    %974 = vmatpush.msra.mxu0 0.0
    %975 = vmatpush.msra.mxu0 0.0
    %976 = vmatpush.msra.mxu0 0.0
    %v977 = vand.u32 %v760, 4294901760
    %v978 = vsub.f32 %v760, %v977
    %979 = vmatpush.msra.mxu0 %v978
    %v980 = vand.u32 %v762, 4294901760
    %v981 = vsub.f32 %v762, %v980
    %982 = vmatmul.f32.gmra.mxu0 %v981
    %v983 = vpop.f32.mrf.mxu0
    %v984 = vadd.f32 %v960, %v983
    %985 = vdwg.mxu0
    %986 = vmatpush.msra.mxu0 0.0
    %987 = vmatpush.msra.mxu0 0.0
    %988 = vmatpush.msra.mxu0 0.0
    %989 = vmatpush.msra.mxu0 0.0
    %990 = vmatpush.msra.mxu0 0.0
    %991 = vmatpush.msra.mxu0 0.0
    %992 = vmatpush.msra.mxu0 0.0
    %993 = vmatpush.msra.mxu0 0.0
    %994 = vmatpush.msra.mxu0 0.0
    %995 = vmatpush.msra.mxu0 0.0
    %996 = vmatpush.msra.mxu0 0.0
    %997 = vmatpush.msra.mxu0 0.0
    %998 = vmatpush.msra.mxu0 0.0
    %999 = vmatpush.msra.mxu0 0.0
    %1000 = vmatpush.msra.mxu0 0.0
    %v1001 = vand.u32 %v760, 4294901760
    %1002 = vmatpush.msra.mxu0 %v1001
    %v1003 = vand.u32 %v762, 4294901760
    %v1004 = vsub.f32 %v762, %v1003
    %v1005 = vand.u32 %v1004, 4294901760
    %1006 = vmatmul.f32.gmra.mxu0 %v1005
    %v1007 = vpop.f32.mrf.mxu0
    %v1008 = vadd.f32 %v984, %v1007
    %1009 = vdwg.mxu0
    %1010 = vmatpush.msra.mxu0 0.0
    %1011 = vmatpush.msra.mxu0 0.0
    %1012 = vmatpush.msra.mxu0 0.0
    %1013 = vmatpush.msra.mxu0 0.0
    %1014 = vmatpush.msra.mxu0 0.0
    %1015 = vmatpush.msra.mxu0 0.0
    %1016 = vmatpush.msra.mxu0 0.0
    %1017 = vmatpush.msra.mxu0 0.0
    %1018 = vmatpush.msra.mxu0 0.0
    %1019 = vmatpush.msra.mxu0 0.0
    %1020 = vmatpush.msra.mxu0 0.0
    %1021 = vmatpush.msra.mxu0 0.0
    %1022 = vmatpush.msra.mxu0 0.0
    %1023 = vmatpush.msra.mxu0 0.0
    %1024 = vmatpush.msra.mxu0 0.0
    %v1025 = vand.u32 %v760, 4294901760
    %v1026 = vsub.f32 %v760, %v1025
    %v1027 = vand.u32 %v1026, 4294901760
    %1028 = vmatpush.msra.mxu0 %v1027
    %v1029 = vand.u32 %v762, 4294901760
    %1030 = vmatmul.f32.gmra.mxu0 %v1029
    %v1031 = vpop.f32.mrf.mxu0
    %v1032 = vadd.f32 %v1008, %v1031
    %1033 = vdwg.mxu0
    %1034 = vmatpush.msra.mxu0 0.0
    %1035 = vmatpush.msra.mxu0 0.0
    %1036 = vmatpush.msra.mxu0 0.0
    %1037 = vmatpush.msra.mxu0 0.0
    %1038 = vmatpush.msra.mxu0 0.0
    %1039 = vmatpush.msra.mxu0 0.0
    %1040 = vmatpush.msra.mxu0 0.0
    %1041 = vmatpush.msra.mxu0 0.0
    %1042 = vmatpush.msra.mxu0 0.0
    %1043 = vmatpush.msra.mxu0 0.0
    %1044 = vmatpush.msra.mxu0 0.0
    %1045 = vmatpush.msra.mxu0 0.0
    %1046 = vmatpush.msra.mxu0 0.0
    %1047 = vmatpush.msra.mxu0 0.0
    %1048 = vmatpush.msra.mxu0 0.0
    %v1049 = vand.u32 %v760, 4294901760
    %1050 = vmatpush.msra.mxu0 %v1049
    %v1051 = vand.u32 %v762, 4294901760
    %1052 = vmatmul.f32.gmra.mxu0 %v1051
    %v1053 = vpop.f32.mrf.mxu0
    %v1054 = vadd.f32 %v1032, %v1053
    %1055 = vdwg.mxu0
    %v1056 = vmul.f32 %v18, %v908
    %v1057 = vmul.f32 %v19, %v1054
    %v1058 = vld [vmem:[%s3] sm:$0xff]
    %v1059 = vld [vmem:[%s3 + $0x8] sm:$0xff]
    %v1060 = vld [vmem:[%s3 + $0x10] sm:$0xff]
    %v1061 = vld [vmem:[%s3 + $0x18] sm:$0xff]
    %v1062 = vld [vmem:[%s3 + $0x20] sm:$0xff]
    %v1063 = vld [vmem:[%s3 + $0x28] sm:$0xff]
    %v1064 = vld [vmem:[%s3 + $0x30] sm:$0xff]
    %v1065 = vld [vmem:[%s3 + $0x38] sm:$0xff]
    %v1066 = vld [vmem:[%s3 + $0x40] sm:$0xff]
    %v1067 = vld [vmem:[%s3 + $0x48] sm:$0xff]
    %v1068 = vld [vmem:[%s3 + $0x50] sm:$0xff]
    %v1069 = vld [vmem:[%s3 + $0x58] sm:$0xff]
    %v1070 = vld [vmem:[%s3 + $0x60] sm:$0xff]
    %v1071 = vld [vmem:[%s3 + $0x68] sm:$0xff]
    %v1072 = vld [vmem:[%s3 + $0x70] sm:$0xff]
    %v1073 = vld [vmem:[%s3 + $0x78] sm:$0xff]
    %v1074 = vld [vmem:[%s3 + $0x80] sm:$0xff]
    %v1075 = vld [vmem:[%s3 + $0x88] sm:$0xff]
    %v1076 = vld [vmem:[%s3 + $0x90] sm:$0xff]
    %v1077 = vld [vmem:[%s3 + $0x98] sm:$0xff]
    %v1078 = vld [vmem:[%s3 + $0xa0] sm:$0xff]
    %v1079 = vld [vmem:[%s3 + $0xa8] sm:$0xff]
    %v1080 = vld [vmem:[%s3 + $0xb0] sm:$0xff]
    %v1081 = vld [vmem:[%s3 + $0xb8] sm:$0xff]
    %v1082 = vld [vmem:[%s3 + $0xc0] sm:$0xff]
    %v1083 = vld [vmem:[%s3 + $0xc8] sm:$0xff]
    %v1084 = vld [vmem:[%s3 + $0xd0] sm:$0xff]
    %v1085 = vld [vmem:[%s3 + $0xd8] sm:$0xff]
    %v1086 = vld [vmem:[%s3 + $0xe0] sm:$0xff]
    %v1087 = vld [vmem:[%s3 + $0xe8] sm:$0xff]
    %v1088 = vld [vmem:[%s3 + $0xf0] sm:$0xff]
    %v1089 = vld [vmem:[%s3 + $0xf8] sm:$0xff]
    %v1090 = vand.u32 %v1073, 4294901760
    %1091 = vmatpush.msra.mxu0 %v1090
    %v1092 = vand.u32 %v1072, 4294901760
    %1093 = vmatpush.msra.mxu0 %v1092
    %v1094 = vand.u32 %v1071, 4294901760
    %1095 = vmatpush.msra.mxu0 %v1094
    %v1096 = vand.u32 %v1070, 4294901760
    %1097 = vmatpush.msra.mxu0 %v1096
    %v1098 = vand.u32 %v1069, 4294901760
    %1099 = vmatpush.msra.mxu0 %v1098
    %v1100 = vand.u32 %v1068, 4294901760
    %1101 = vmatpush.msra.mxu0 %v1100
    %v1102 = vand.u32 %v1067, 4294901760
    %1103 = vmatpush.msra.mxu0 %v1102
    %v1104 = vand.u32 %v1066, 4294901760
    %1105 = vmatpush.msra.mxu0 %v1104
    %v1106 = vand.u32 %v1065, 4294901760
    %1107 = vmatpush.msra.mxu0 %v1106
    %v1108 = vand.u32 %v1064, 4294901760
    %1109 = vmatpush.msra.mxu0 %v1108
    %v1110 = vand.u32 %v1063, 4294901760
    %1111 = vmatpush.msra.mxu0 %v1110
    %v1112 = vand.u32 %v1062, 4294901760
    %1113 = vmatpush.msra.mxu0 %v1112
    %v1114 = vand.u32 %v1061, 4294901760
    %1115 = vmatpush.msra.mxu0 %v1114
    %v1116 = vand.u32 %v1060, 4294901760
    %1117 = vmatpush.msra.mxu0 %v1116
    %v1118 = vand.u32 %v1059, 4294901760
    %1119 = vmatpush.msra.mxu0 %v1118
    %v1120 = vand.u32 %v1058, 4294901760
    %1121 = vmatpush.msra.mxu0 %v1120
    %v1122 = vand.u32 %v1056, 4294901760
    %v1123 = vsub.f32 %v1056, %v1122
    %v1124 = vand.u32 %v1123, 4294901760
    %v1125 = vsub.f32 %v1123, %v1124
    %v1126 = vand.u32 %v1125, 4294901760
    %1127 = vmatmul.f32.gmra.mxu0 %v1126
    %v1128 = vpop.f32.mrf.mxu0
    %v1129 = vadd.f32 0.0, %v1128
    %1130 = vdwg.mxu0
    %v1131 = vand.u32 %v1073, 4294901760
    %v1132 = vsub.f32 %v1073, %v1131
    %v1133 = vand.u32 %v1132, 4294901760
    %v1134 = vsub.f32 %v1132, %v1133
    %v1135 = vand.u32 %v1134, 4294901760
    %1136 = vmatpush.msra.mxu0 %v1135
    %v1137 = vand.u32 %v1072, 4294901760
    %v1138 = vsub.f32 %v1072, %v1137
    %v1139 = vand.u32 %v1138, 4294901760
    %v1140 = vsub.f32 %v1138, %v1139
    %v1141 = vand.u32 %v1140, 4294901760
    %1142 = vmatpush.msra.mxu0 %v1141
    %v1143 = vand.u32 %v1071, 4294901760
    %v1144 = vsub.f32 %v1071, %v1143
    %v1145 = vand.u32 %v1144, 4294901760
    %v1146 = vsub.f32 %v1144, %v1145
    %v1147 = vand.u32 %v1146, 4294901760
    %1148 = vmatpush.msra.mxu0 %v1147
    %v1149 = vand.u32 %v1070, 4294901760
    %v1150 = vsub.f32 %v1070, %v1149
    %v1151 = vand.u32 %v1150, 4294901760
    %v1152 = vsub.f32 %v1150, %v1151
    %v1153 = vand.u32 %v1152, 4294901760
    %1154 = vmatpush.msra.mxu0 %v1153
    %v1155 = vand.u32 %v1069, 4294901760
    %v1156 = vsub.f32 %v1069, %v1155
    %v1157 = vand.u32 %v1156, 4294901760
    %v1158 = vsub.f32 %v1156, %v1157
    %v1159 = vand.u32 %v1158, 4294901760
    %1160 = vmatpush.msra.mxu0 %v1159
    %v1161 = vand.u32 %v1068, 4294901760
    %v1162 = vsub.f32 %v1068, %v1161
    %v1163 = vand.u32 %v1162, 4294901760
    %v1164 = vsub.f32 %v1162, %v1163
    %v1165 = vand.u32 %v1164, 4294901760
    %1166 = vmatpush.msra.mxu0 %v1165
    %v1167 = vand.u32 %v1067, 4294901760
    %v1168 = vsub.f32 %v1067, %v1167
    %v1169 = vand.u32 %v1168, 4294901760
    %v1170 = vsub.f32 %v1168, %v1169
    %v1171 = vand.u32 %v1170, 4294901760
    %1172 = vmatpush.msra.mxu0 %v1171
    %v1173 = vand.u32 %v1066, 4294901760
    %v1174 = vsub.f32 %v1066, %v1173
    %v1175 = vand.u32 %v1174, 4294901760
    %v1176 = vsub.f32 %v1174, %v1175
    %v1177 = vand.u32 %v1176, 4294901760
    %1178 = vmatpush.msra.mxu0 %v1177
    %v1179 = vand.u32 %v1065, 4294901760
    %v1180 = vsub.f32 %v1065, %v1179
    %v1181 = vand.u32 %v1180, 4294901760
    %v1182 = vsub.f32 %v1180, %v1181
    %v1183 = vand.u32 %v1182, 4294901760
    %1184 = vmatpush.msra.mxu0 %v1183
    %v1185 = vand.u32 %v1064, 4294901760
    %v1186 = vsub.f32 %v1064, %v1185
    %v1187 = vand.u32 %v1186, 4294901760
    %v1188 = vsub.f32 %v1186, %v1187
    %v1189 = vand.u32 %v1188, 4294901760
    %1190 = vmatpush.msra.mxu0 %v1189
    %v1191 = vand.u32 %v1063, 4294901760
    %v1192 = vsub.f32 %v1063, %v1191
    %v1193 = vand.u32 %v1192, 4294901760
    %v1194 = vsub.f32 %v1192, %v1193
    %v1195 = vand.u32 %v1194, 4294901760
    %1196 = vmatpush.msra.mxu0 %v1195
    %v1197 = vand.u32 %v1062, 4294901760
    %v1198 = vsub.f32 %v1062, %v1197
    %v1199 = vand.u32 %v1198, 4294901760
    %v1200 = vsub.f32 %v1198, %v1199
    %v1201 = vand.u32 %v1200, 4294901760
    %1202 = vmatpush.msra.mxu0 %v1201
    %v1203 = vand.u32 %v1061, 4294901760
    %v1204 = vsub.f32 %v1061, %v1203
    %v1205 = vand.u32 %v1204, 4294901760
    %v1206 = vsub.f32 %v1204, %v1205
    %v1207 = vand.u32 %v1206, 4294901760
    %1208 = vmatpush.msra.mxu0 %v1207
    %v1209 = vand.u32 %v1060, 4294901760
    %v1210 = vsub.f32 %v1060, %v1209
    %v1211 = vand.u32 %v1210, 4294901760
    %v1212 = vsub.f32 %v1210, %v1211
    %v1213 = vand.u32 %v1212, 4294901760
    %1214 = vmatpush.msra.mxu0 %v1213
    %v1215 = vand.u32 %v1059, 4294901760
    %v1216 = vsub.f32 %v1059, %v1215
    %v1217 = vand.u32 %v1216, 4294901760
    %v1218 = vsub.f32 %v1216, %v1217
    %v1219 = vand.u32 %v1218, 4294901760
    %1220 = vmatpush.msra.mxu0 %v1219
    %v1221 = vand.u32 %v1058, 4294901760
    %v1222 = vsub.f32 %v1058, %v1221
    %v1223 = vand.u32 %v1222, 4294901760
    %v1224 = vsub.f32 %v1222, %v1223
    %v1225 = vand.u32 %v1224, 4294901760
    %1226 = vmatpush.msra.mxu0 %v1225
    %v1227 = vand.u32 %v1056, 4294901760
    %1228 = vmatmul.f32.gmra.mxu0 %v1227
    %v1229 = vpop.f32.mrf.mxu0
    %v1230 = vadd.f32 %v1129, %v1229
    %1231 = vdwg.mxu0
    %v1232 = vand.u32 %v1073, 4294901760
    %v1233 = vsub.f32 %v1073, %v1232
    %1234 = vmatpush.msra.mxu0 %v1233
    %v1235 = vand.u32 %v1072, 4294901760
    %v1236 = vsub.f32 %v1072, %v1235
    %1237 = vmatpush.msra.mxu0 %v1236
    %v1238 = vand.u32 %v1071, 4294901760
    %v1239 = vsub.f32 %v1071, %v1238
    %1240 = vmatpush.msra.mxu0 %v1239
    %v1241 = vand.u32 %v1070, 4294901760
    %v1242 = vsub.f32 %v1070, %v1241
    %1243 = vmatpush.msra.mxu0 %v1242
    %v1244 = vand.u32 %v1069, 4294901760
    %v1245 = vsub.f32 %v1069, %v1244
    %1246 = vmatpush.msra.mxu0 %v1245
    %v1247 = vand.u32 %v1068, 4294901760
    %v1248 = vsub.f32 %v1068, %v1247
    %1249 = vmatpush.msra.mxu0 %v1248
    %v1250 = vand.u32 %v1067, 4294901760
    %v1251 = vsub.f32 %v1067, %v1250
    %1252 = vmatpush.msra.mxu0 %v1251
    %v1253 = vand.u32 %v1066, 4294901760
    %v1254 = vsub.f32 %v1066, %v1253
    %1255 = vmatpush.msra.mxu0 %v1254
    %v1256 = vand.u32 %v1065, 4294901760
    %v1257 = vsub.f32 %v1065, %v1256
    %1258 = vmatpush.msra.mxu0 %v1257
    %v1259 = vand.u32 %v1064, 4294901760
    %v1260 = vsub.f32 %v1064, %v1259
    %1261 = vmatpush.msra.mxu0 %v1260
    %v1262 = vand.u32 %v1063, 4294901760
    %v1263 = vsub.f32 %v1063, %v1262
    %1264 = vmatpush.msra.mxu0 %v1263
    %v1265 = vand.u32 %v1062, 4294901760
    %v1266 = vsub.f32 %v1062, %v1265
    %1267 = vmatpush.msra.mxu0 %v1266
    %v1268 = vand.u32 %v1061, 4294901760
    %v1269 = vsub.f32 %v1061, %v1268
    %1270 = vmatpush.msra.mxu0 %v1269
    %v1271 = vand.u32 %v1060, 4294901760
    %v1272 = vsub.f32 %v1060, %v1271
    %1273 = vmatpush.msra.mxu0 %v1272
    %v1274 = vand.u32 %v1059, 4294901760
    %v1275 = vsub.f32 %v1059, %v1274
    %1276 = vmatpush.msra.mxu0 %v1275
    %v1277 = vand.u32 %v1058, 4294901760
    %v1278 = vsub.f32 %v1058, %v1277
    %1279 = vmatpush.msra.mxu0 %v1278
    %v1280 = vand.u32 %v1056, 4294901760
    %v1281 = vsub.f32 %v1056, %v1280
    %1282 = vmatmul.f32.gmra.mxu0 %v1281
    %v1283 = vpop.f32.mrf.mxu0
    %v1284 = vadd.f32 %v1230, %v1283
    %1285 = vdwg.mxu0
    %v1286 = vand.u32 %v1073, 4294901760
    %1287 = vmatpush.msra.mxu0 %v1286
    %v1288 = vand.u32 %v1072, 4294901760
    %1289 = vmatpush.msra.mxu0 %v1288
    %v1290 = vand.u32 %v1071, 4294901760
    %1291 = vmatpush.msra.mxu0 %v1290
    %v1292 = vand.u32 %v1070, 4294901760
    %1293 = vmatpush.msra.mxu0 %v1292
    %v1294 = vand.u32 %v1069, 4294901760
    %1295 = vmatpush.msra.mxu0 %v1294
    %v1296 = vand.u32 %v1068, 4294901760
    %1297 = vmatpush.msra.mxu0 %v1296
    %v1298 = vand.u32 %v1067, 4294901760
    %1299 = vmatpush.msra.mxu0 %v1298
    %v1300 = vand.u32 %v1066, 4294901760
    %1301 = vmatpush.msra.mxu0 %v1300
    %v1302 = vand.u32 %v1065, 4294901760
    %1303 = vmatpush.msra.mxu0 %v1302
    %v1304 = vand.u32 %v1064, 4294901760
    %1305 = vmatpush.msra.mxu0 %v1304
    %v1306 = vand.u32 %v1063, 4294901760
    %1307 = vmatpush.msra.mxu0 %v1306
    %v1308 = vand.u32 %v1062, 4294901760
    %1309 = vmatpush.msra.mxu0 %v1308
    %v1310 = vand.u32 %v1061, 4294901760
    %1311 = vmatpush.msra.mxu0 %v1310
    %v1312 = vand.u32 %v1060, 4294901760
    %1313 = vmatpush.msra.mxu0 %v1312
    %v1314 = vand.u32 %v1059, 4294901760
    %1315 = vmatpush.msra.mxu0 %v1314
    %v1316 = vand.u32 %v1058, 4294901760
    %1317 = vmatpush.msra.mxu0 %v1316
    %v1318 = vand.u32 %v1056, 4294901760
    %v1319 = vsub.f32 %v1056, %v1318
    %v1320 = vand.u32 %v1319, 4294901760
    %1321 = vmatmul.f32.gmra.mxu0 %v1320
    %v1322 = vpop.f32.mrf.mxu0
    %v1323 = vadd.f32 %v1284, %v1322
    %1324 = vdwg.mxu0
    %v1325 = vand.u32 %v1073, 4294901760
    %v1326 = vsub.f32 %v1073, %v1325
    %v1327 = vand.u32 %v1326, 4294901760
    %1328 = vmatpush.msra.mxu0 %v1327
    %v1329 = vand.u32 %v1072, 4294901760
    %v1330 = vsub.f32 %v1072, %v1329
    %v1331 = vand.u32 %v1330, 4294901760
    %1332 = vmatpush.msra.mxu0 %v1331
    %v1333 = vand.u32 %v1071, 4294901760
    %v1334 = vsub.f32 %v1071, %v1333
    %v1335 = vand.u32 %v1334, 4294901760
    %1336 = vmatpush.msra.mxu0 %v1335
    %v1337 = vand.u32 %v1070, 4294901760
    %v1338 = vsub.f32 %v1070, %v1337
    %v1339 = vand.u32 %v1338, 4294901760
    %1340 = vmatpush.msra.mxu0 %v1339
    %v1341 = vand.u32 %v1069, 4294901760
    %v1342 = vsub.f32 %v1069, %v1341
    %v1343 = vand.u32 %v1342, 4294901760
    %1344 = vmatpush.msra.mxu0 %v1343
    %v1345 = vand.u32 %v1068, 4294901760
    %v1346 = vsub.f32 %v1068, %v1345
    %v1347 = vand.u32 %v1346, 4294901760
    %1348 = vmatpush.msra.mxu0 %v1347
    %v1349 = vand.u32 %v1067, 4294901760
    %v1350 = vsub.f32 %v1067, %v1349
    %v1351 = vand.u32 %v1350, 4294901760
    %1352 = vmatpush.msra.mxu0 %v1351
    %v1353 = vand.u32 %v1066, 4294901760
    %v1354 = vsub.f32 %v1066, %v1353
    %v1355 = vand.u32 %v1354, 4294901760
    %1356 = vmatpush.msra.mxu0 %v1355
    %v1357 = vand.u32 %v1065, 4294901760
    %v1358 = vsub.f32 %v1065, %v1357
    %v1359 = vand.u32 %v1358, 4294901760
    %1360 = vmatpush.msra.mxu0 %v1359
    %v1361 = vand.u32 %v1064, 4294901760
    %v1362 = vsub.f32 %v1064, %v1361
    %v1363 = vand.u32 %v1362, 4294901760
    %1364 = vmatpush.msra.mxu0 %v1363
    %v1365 = vand.u32 %v1063, 4294901760
    %v1366 = vsub.f32 %v1063, %v1365
    %v1367 = vand.u32 %v1366, 4294901760
    %1368 = vmatpush.msra.mxu0 %v1367
    %v1369 = vand.u32 %v1062, 4294901760
    %v1370 = vsub.f32 %v1062, %v1369
    %v1371 = vand.u32 %v1370, 4294901760
    %1372 = vmatpush.msra.mxu0 %v1371
    %v1373 = vand.u32 %v1061, 4294901760
    %v1374 = vsub.f32 %v1061, %v1373
    %v1375 = vand.u32 %v1374, 4294901760
    %1376 = vmatpush.msra.mxu0 %v1375
    %v1377 = vand.u32 %v1060, 4294901760
    %v1378 = vsub.f32 %v1060, %v1377
    %v1379 = vand.u32 %v1378, 4294901760
    %1380 = vmatpush.msra.mxu0 %v1379
    %v1381 = vand.u32 %v1059, 4294901760
    %v1382 = vsub.f32 %v1059, %v1381
    %v1383 = vand.u32 %v1382, 4294901760
    %1384 = vmatpush.msra.mxu0 %v1383
    %v1385 = vand.u32 %v1058, 4294901760
    %v1386 = vsub.f32 %v1058, %v1385
    %v1387 = vand.u32 %v1386, 4294901760
    %1388 = vmatpush.msra.mxu0 %v1387
    %v1389 = vand.u32 %v1056, 4294901760
    %1390 = vmatmul.f32.gmra.mxu0 %v1389
    %v1391 = vpop.f32.mrf.mxu0
    %v1392 = vadd.f32 %v1323, %v1391
    %1393 = vdwg.mxu0
    %v1394 = vand.u32 %v1073, 4294901760
    %1395 = vmatpush.msra.mxu0 %v1394
    %v1396 = vand.u32 %v1072, 4294901760
    %1397 = vmatpush.msra.mxu0 %v1396
    %v1398 = vand.u32 %v1071, 4294901760
    %1399 = vmatpush.msra.mxu0 %v1398
    %v1400 = vand.u32 %v1070, 4294901760
    %1401 = vmatpush.msra.mxu0 %v1400
    %v1402 = vand.u32 %v1069, 4294901760
    %1403 = vmatpush.msra.mxu0 %v1402
    %v1404 = vand.u32 %v1068, 4294901760
    %1405 = vmatpush.msra.mxu0 %v1404
    %v1406 = vand.u32 %v1067, 4294901760
    %1407 = vmatpush.msra.mxu0 %v1406
    %v1408 = vand.u32 %v1066, 4294901760
    %1409 = vmatpush.msra.mxu0 %v1408
    %v1410 = vand.u32 %v1065, 4294901760
    %1411 = vmatpush.msra.mxu0 %v1410
    %v1412 = vand.u32 %v1064, 4294901760
    %1413 = vmatpush.msra.mxu0 %v1412
    %v1414 = vand.u32 %v1063, 4294901760
    %1415 = vmatpush.msra.mxu0 %v1414
    %v1416 = vand.u32 %v1062, 4294901760
    %1417 = vmatpush.msra.mxu0 %v1416
    %v1418 = vand.u32 %v1061, 4294901760
    %1419 = vmatpush.msra.mxu0 %v1418
    %v1420 = vand.u32 %v1060, 4294901760
    %1421 = vmatpush.msra.mxu0 %v1420
    %v1422 = vand.u32 %v1059, 4294901760
    %1423 = vmatpush.msra.mxu0 %v1422
    %v1424 = vand.u32 %v1058, 4294901760
    %1425 = vmatpush.msra.mxu0 %v1424
    %v1426 = vand.u32 %v1056, 4294901760
    %1427 = vmatmul.f32.gmra.mxu0 %v1426
    %v1428 = vpop.f32.mrf.mxu0
    %v1429 = vadd.f32 %v1392, %v1428
    %1430 = vdwg.mxu0
    %v1431 = vand.u32 %v1089, 4294901760
    %1432 = vmatpush.msra.mxu0 %v1431
    %v1433 = vand.u32 %v1088, 4294901760
    %1434 = vmatpush.msra.mxu0 %v1433
    %v1435 = vand.u32 %v1087, 4294901760
    %1436 = vmatpush.msra.mxu0 %v1435
    %v1437 = vand.u32 %v1086, 4294901760
    %1438 = vmatpush.msra.mxu0 %v1437
    %v1439 = vand.u32 %v1085, 4294901760
    %1440 = vmatpush.msra.mxu0 %v1439
    %v1441 = vand.u32 %v1084, 4294901760
    %1442 = vmatpush.msra.mxu0 %v1441
    %v1443 = vand.u32 %v1083, 4294901760
    %1444 = vmatpush.msra.mxu0 %v1443
    %v1445 = vand.u32 %v1082, 4294901760
    %1446 = vmatpush.msra.mxu0 %v1445
    %v1447 = vand.u32 %v1081, 4294901760
    %1448 = vmatpush.msra.mxu0 %v1447
    %v1449 = vand.u32 %v1080, 4294901760
    %1450 = vmatpush.msra.mxu0 %v1449
    %v1451 = vand.u32 %v1079, 4294901760
    %1452 = vmatpush.msra.mxu0 %v1451
    %v1453 = vand.u32 %v1078, 4294901760
    %1454 = vmatpush.msra.mxu0 %v1453
    %v1455 = vand.u32 %v1077, 4294901760
    %1456 = vmatpush.msra.mxu0 %v1455
    %v1457 = vand.u32 %v1076, 4294901760
    %1458 = vmatpush.msra.mxu0 %v1457
    %v1459 = vand.u32 %v1075, 4294901760
    %1460 = vmatpush.msra.mxu0 %v1459
    %v1461 = vand.u32 %v1074, 4294901760
    %1462 = vmatpush.msra.mxu0 %v1461
    %v1463 = vand.u32 %v1057, 4294901760
    %v1464 = vsub.f32 %v1057, %v1463
    %v1465 = vand.u32 %v1464, 4294901760
    %v1466 = vsub.f32 %v1464, %v1465
    %v1467 = vand.u32 %v1466, 4294901760
    %1468 = vmatmul.f32.gmra.mxu0 %v1467
    %v1469 = vpop.f32.mrf.mxu0
    %v1470 = vadd.f32 %v1429, %v1469
    %1471 = vdwg.mxu0
    %v1472 = vand.u32 %v1089, 4294901760
    %v1473 = vsub.f32 %v1089, %v1472
    %v1474 = vand.u32 %v1473, 4294901760
    %v1475 = vsub.f32 %v1473, %v1474
    %v1476 = vand.u32 %v1475, 4294901760
    %1477 = vmatpush.msra.mxu0 %v1476
    %v1478 = vand.u32 %v1088, 4294901760
    %v1479 = vsub.f32 %v1088, %v1478
    %v1480 = vand.u32 %v1479, 4294901760
    %v1481 = vsub.f32 %v1479, %v1480
    %v1482 = vand.u32 %v1481, 4294901760
    %1483 = vmatpush.msra.mxu0 %v1482
    %v1484 = vand.u32 %v1087, 4294901760
    %v1485 = vsub.f32 %v1087, %v1484
    %v1486 = vand.u32 %v1485, 4294901760
    %v1487 = vsub.f32 %v1485, %v1486
    %v1488 = vand.u32 %v1487, 4294901760
    %1489 = vmatpush.msra.mxu0 %v1488
    %v1490 = vand.u32 %v1086, 4294901760
    %v1491 = vsub.f32 %v1086, %v1490
    %v1492 = vand.u32 %v1491, 4294901760
    %v1493 = vsub.f32 %v1491, %v1492
    %v1494 = vand.u32 %v1493, 4294901760
    %1495 = vmatpush.msra.mxu0 %v1494
    %v1496 = vand.u32 %v1085, 4294901760
    %v1497 = vsub.f32 %v1085, %v1496
    %v1498 = vand.u32 %v1497, 4294901760
    %v1499 = vsub.f32 %v1497, %v1498
    %v1500 = vand.u32 %v1499, 4294901760
    %1501 = vmatpush.msra.mxu0 %v1500
    %v1502 = vand.u32 %v1084, 4294901760
    %v1503 = vsub.f32 %v1084, %v1502
    %v1504 = vand.u32 %v1503, 4294901760
    %v1505 = vsub.f32 %v1503, %v1504
    %v1506 = vand.u32 %v1505, 4294901760
    %1507 = vmatpush.msra.mxu0 %v1506
    %v1508 = vand.u32 %v1083, 4294901760
    %v1509 = vsub.f32 %v1083, %v1508
    %v1510 = vand.u32 %v1509, 4294901760
    %v1511 = vsub.f32 %v1509, %v1510
    %v1512 = vand.u32 %v1511, 4294901760
    %1513 = vmatpush.msra.mxu0 %v1512
    %v1514 = vand.u32 %v1082, 4294901760
    %v1515 = vsub.f32 %v1082, %v1514
    %v1516 = vand.u32 %v1515, 4294901760
    %v1517 = vsub.f32 %v1515, %v1516
    %v1518 = vand.u32 %v1517, 4294901760
    %1519 = vmatpush.msra.mxu0 %v1518
    %v1520 = vand.u32 %v1081, 4294901760
    %v1521 = vsub.f32 %v1081, %v1520
    %v1522 = vand.u32 %v1521, 4294901760
    %v1523 = vsub.f32 %v1521, %v1522
    %v1524 = vand.u32 %v1523, 4294901760
    %1525 = vmatpush.msra.mxu0 %v1524
    %v1526 = vand.u32 %v1080, 4294901760
    %v1527 = vsub.f32 %v1080, %v1526
    %v1528 = vand.u32 %v1527, 4294901760
    %v1529 = vsub.f32 %v1527, %v1528
    %v1530 = vand.u32 %v1529, 4294901760
    %1531 = vmatpush.msra.mxu0 %v1530
    %v1532 = vand.u32 %v1079, 4294901760
    %v1533 = vsub.f32 %v1079, %v1532
    %v1534 = vand.u32 %v1533, 4294901760
    %v1535 = vsub.f32 %v1533, %v1534
    %v1536 = vand.u32 %v1535, 4294901760
    %1537 = vmatpush.msra.mxu0 %v1536
    %v1538 = vand.u32 %v1078, 4294901760
    %v1539 = vsub.f32 %v1078, %v1538
    %v1540 = vand.u32 %v1539, 4294901760
    %v1541 = vsub.f32 %v1539, %v1540
    %v1542 = vand.u32 %v1541, 4294901760
    %1543 = vmatpush.msra.mxu0 %v1542
    %v1544 = vand.u32 %v1077, 4294901760
    %v1545 = vsub.f32 %v1077, %v1544
    %v1546 = vand.u32 %v1545, 4294901760
    %v1547 = vsub.f32 %v1545, %v1546
    %v1548 = vand.u32 %v1547, 4294901760
    %1549 = vmatpush.msra.mxu0 %v1548
    %v1550 = vand.u32 %v1076, 4294901760
    %v1551 = vsub.f32 %v1076, %v1550
    %v1552 = vand.u32 %v1551, 4294901760
    %v1553 = vsub.f32 %v1551, %v1552
    %v1554 = vand.u32 %v1553, 4294901760
    %1555 = vmatpush.msra.mxu0 %v1554
    %v1556 = vand.u32 %v1075, 4294901760
    %v1557 = vsub.f32 %v1075, %v1556
    %v1558 = vand.u32 %v1557, 4294901760
    %v1559 = vsub.f32 %v1557, %v1558
    %v1560 = vand.u32 %v1559, 4294901760
    %1561 = vmatpush.msra.mxu0 %v1560
    %v1562 = vand.u32 %v1074, 4294901760
    %v1563 = vsub.f32 %v1074, %v1562
    %v1564 = vand.u32 %v1563, 4294901760
    %v1565 = vsub.f32 %v1563, %v1564
    %v1566 = vand.u32 %v1565, 4294901760
    %1567 = vmatpush.msra.mxu0 %v1566
    %v1568 = vand.u32 %v1057, 4294901760
    %1569 = vmatmul.f32.gmra.mxu0 %v1568
    %v1570 = vpop.f32.mrf.mxu0
    %v1571 = vadd.f32 %v1470, %v1570
    %1572 = vdwg.mxu0
    %v1573 = vand.u32 %v1089, 4294901760
    %v1574 = vsub.f32 %v1089, %v1573
    %1575 = vmatpush.msra.mxu0 %v1574
    %v1576 = vand.u32 %v1088, 4294901760
    %v1577 = vsub.f32 %v1088, %v1576
    %1578 = vmatpush.msra.mxu0 %v1577
    %v1579 = vand.u32 %v1087, 4294901760
    %v1580 = vsub.f32 %v1087, %v1579
    %1581 = vmatpush.msra.mxu0 %v1580
    %v1582 = vand.u32 %v1086, 4294901760
    %v1583 = vsub.f32 %v1086, %v1582
    %1584 = vmatpush.msra.mxu0 %v1583
    %v1585 = vand.u32 %v1085, 4294901760
    %v1586 = vsub.f32 %v1085, %v1585
    %1587 = vmatpush.msra.mxu0 %v1586
    %v1588 = vand.u32 %v1084, 4294901760
    %v1589 = vsub.f32 %v1084, %v1588
    %1590 = vmatpush.msra.mxu0 %v1589
    %v1591 = vand.u32 %v1083, 4294901760
    %v1592 = vsub.f32 %v1083, %v1591
    %1593 = vmatpush.msra.mxu0 %v1592
    %v1594 = vand.u32 %v1082, 4294901760
    %v1595 = vsub.f32 %v1082, %v1594
    %1596 = vmatpush.msra.mxu0 %v1595
    %v1597 = vand.u32 %v1081, 4294901760
    %v1598 = vsub.f32 %v1081, %v1597
    %1599 = vmatpush.msra.mxu0 %v1598
    %v1600 = vand.u32 %v1080, 4294901760
    %v1601 = vsub.f32 %v1080, %v1600
    %1602 = vmatpush.msra.mxu0 %v1601
    %v1603 = vand.u32 %v1079, 4294901760
    %v1604 = vsub.f32 %v1079, %v1603
    %1605 = vmatpush.msra.mxu0 %v1604
    %v1606 = vand.u32 %v1078, 4294901760
    %v1607 = vsub.f32 %v1078, %v1606
    %1608 = vmatpush.msra.mxu0 %v1607
    %v1609 = vand.u32 %v1077, 4294901760
    %v1610 = vsub.f32 %v1077, %v1609
    %1611 = vmatpush.msra.mxu0 %v1610
    %v1612 = vand.u32 %v1076, 4294901760
    %v1613 = vsub.f32 %v1076, %v1612
    %1614 = vmatpush.msra.mxu0 %v1613
    %v1615 = vand.u32 %v1075, 4294901760
    %v1616 = vsub.f32 %v1075, %v1615
    %1617 = vmatpush.msra.mxu0 %v1616
    %v1618 = vand.u32 %v1074, 4294901760
    %v1619 = vsub.f32 %v1074, %v1618
    %1620 = vmatpush.msra.mxu0 %v1619
    %v1621 = vand.u32 %v1057, 4294901760
    %v1622 = vsub.f32 %v1057, %v1621
    %1623 = vmatmul.f32.gmra.mxu0 %v1622
    %v1624 = vpop.f32.mrf.mxu0
    %v1625 = vadd.f32 %v1571, %v1624
    %1626 = vdwg.mxu0
    %v1627 = vand.u32 %v1089, 4294901760
    %1628 = vmatpush.msra.mxu0 %v1627
    %v1629 = vand.u32 %v1088, 4294901760
    %1630 = vmatpush.msra.mxu0 %v1629
    %v1631 = vand.u32 %v1087, 4294901760
    %1632 = vmatpush.msra.mxu0 %v1631
    %v1633 = vand.u32 %v1086, 4294901760
    %1634 = vmatpush.msra.mxu0 %v1633
    %v1635 = vand.u32 %v1085, 4294901760
    %1636 = vmatpush.msra.mxu0 %v1635
    %v1637 = vand.u32 %v1084, 4294901760
    %1638 = vmatpush.msra.mxu0 %v1637
    %v1639 = vand.u32 %v1083, 4294901760
    %1640 = vmatpush.msra.mxu0 %v1639
    %v1641 = vand.u32 %v1082, 4294901760
    %1642 = vmatpush.msra.mxu0 %v1641
    %v1643 = vand.u32 %v1081, 4294901760
    %1644 = vmatpush.msra.mxu0 %v1643
    %v1645 = vand.u32 %v1080, 4294901760
    %1646 = vmatpush.msra.mxu0 %v1645
    %v1647 = vand.u32 %v1079, 4294901760
    %1648 = vmatpush.msra.mxu0 %v1647
    %v1649 = vand.u32 %v1078, 4294901760
    %1650 = vmatpush.msra.mxu0 %v1649
    %v1651 = vand.u32 %v1077, 4294901760
    %1652 = vmatpush.msra.mxu0 %v1651
    %v1653 = vand.u32 %v1076, 4294901760
    %1654 = vmatpush.msra.mxu0 %v1653
    %v1655 = vand.u32 %v1075, 4294901760
    %1656 = vmatpush.msra.mxu0 %v1655
    %v1657 = vand.u32 %v1074, 4294901760
    %1658 = vmatpush.msra.mxu0 %v1657
    %v1659 = vand.u32 %v1057, 4294901760
    %v1660 = vsub.f32 %v1057, %v1659
    %v1661 = vand.u32 %v1660, 4294901760
    %1662 = vmatmul.f32.gmra.mxu0 %v1661
    %v1663 = vpop.f32.mrf.mxu0
    %v1664 = vadd.f32 %v1625, %v1663
    %1665 = vdwg.mxu0
    %v1666 = vand.u32 %v1089, 4294901760
    %v1667 = vsub.f32 %v1089, %v1666
    %v1668 = vand.u32 %v1667, 4294901760
    %1669 = vmatpush.msra.mxu0 %v1668
    %v1670 = vand.u32 %v1088, 4294901760
    %v1671 = vsub.f32 %v1088, %v1670
    %v1672 = vand.u32 %v1671, 4294901760
    %1673 = vmatpush.msra.mxu0 %v1672
    %v1674 = vand.u32 %v1087, 4294901760
    %v1675 = vsub.f32 %v1087, %v1674
    %v1676 = vand.u32 %v1675, 4294901760
    %1677 = vmatpush.msra.mxu0 %v1676
    %v1678 = vand.u32 %v1086, 4294901760
    %v1679 = vsub.f32 %v1086, %v1678
    %v1680 = vand.u32 %v1679, 4294901760
    %1681 = vmatpush.msra.mxu0 %v1680
    %v1682 = vand.u32 %v1085, 4294901760
    %v1683 = vsub.f32 %v1085, %v1682
    %v1684 = vand.u32 %v1683, 4294901760
    %1685 = vmatpush.msra.mxu0 %v1684
    %v1686 = vand.u32 %v1084, 4294901760
    %v1687 = vsub.f32 %v1084, %v1686
    %v1688 = vand.u32 %v1687, 4294901760
    %1689 = vmatpush.msra.mxu0 %v1688
    %v1690 = vand.u32 %v1083, 4294901760
    %v1691 = vsub.f32 %v1083, %v1690
    %v1692 = vand.u32 %v1691, 4294901760
    %1693 = vmatpush.msra.mxu0 %v1692
    %v1694 = vand.u32 %v1082, 4294901760
    %v1695 = vsub.f32 %v1082, %v1694
    %v1696 = vand.u32 %v1695, 4294901760
    %1697 = vmatpush.msra.mxu0 %v1696
    %v1698 = vand.u32 %v1081, 4294901760
    %v1699 = vsub.f32 %v1081, %v1698
    %v1700 = vand.u32 %v1699, 4294901760
    %1701 = vmatpush.msra.mxu0 %v1700
    %v1702 = vand.u32 %v1080, 4294901760
    %v1703 = vsub.f32 %v1080, %v1702
    %v1704 = vand.u32 %v1703, 4294901760
    %1705 = vmatpush.msra.mxu0 %v1704
    %v1706 = vand.u32 %v1079, 4294901760
    %v1707 = vsub.f32 %v1079, %v1706
    %v1708 = vand.u32 %v1707, 4294901760
    %1709 = vmatpush.msra.mxu0 %v1708
    %v1710 = vand.u32 %v1078, 4294901760
    %v1711 = vsub.f32 %v1078, %v1710
    %v1712 = vand.u32 %v1711, 4294901760
    %1713 = vmatpush.msra.mxu0 %v1712
    %v1714 = vand.u32 %v1077, 4294901760
    %v1715 = vsub.f32 %v1077, %v1714
    %v1716 = vand.u32 %v1715, 4294901760
    %1717 = vmatpush.msra.mxu0 %v1716
    %v1718 = vand.u32 %v1076, 4294901760
    %v1719 = vsub.f32 %v1076, %v1718
    %v1720 = vand.u32 %v1719, 4294901760
    %1721 = vmatpush.msra.mxu0 %v1720
    %v1722 = vand.u32 %v1075, 4294901760
    %v1723 = vsub.f32 %v1075, %v1722
    %v1724 = vand.u32 %v1723, 4294901760
    %1725 = vmatpush.msra.mxu0 %v1724
    %v1726 = vand.u32 %v1074, 4294901760
    %v1727 = vsub.f32 %v1074, %v1726
    %v1728 = vand.u32 %v1727, 4294901760
    %1729 = vmatpush.msra.mxu0 %v1728
    %v1730 = vand.u32 %v1057, 4294901760
    %1731 = vmatmul.f32.gmra.mxu0 %v1730
    %v1732 = vpop.f32.mrf.mxu0
    %v1733 = vadd.f32 %v1664, %v1732
    %1734 = vdwg.mxu0
    %v1735 = vand.u32 %v1089, 4294901760
    %1736 = vmatpush.msra.mxu0 %v1735
    %v1737 = vand.u32 %v1088, 4294901760
    %1738 = vmatpush.msra.mxu0 %v1737
    %v1739 = vand.u32 %v1087, 4294901760
    %1740 = vmatpush.msra.mxu0 %v1739
    %v1741 = vand.u32 %v1086, 4294901760
    %1742 = vmatpush.msra.mxu0 %v1741
    %v1743 = vand.u32 %v1085, 4294901760
    %1744 = vmatpush.msra.mxu0 %v1743
    %v1745 = vand.u32 %v1084, 4294901760
    %1746 = vmatpush.msra.mxu0 %v1745
    %v1747 = vand.u32 %v1083, 4294901760
    %1748 = vmatpush.msra.mxu0 %v1747
    %v1749 = vand.u32 %v1082, 4294901760
    %1750 = vmatpush.msra.mxu0 %v1749
    %v1751 = vand.u32 %v1081, 4294901760
    %1752 = vmatpush.msra.mxu0 %v1751
    %v1753 = vand.u32 %v1080, 4294901760
    %1754 = vmatpush.msra.mxu0 %v1753
    %v1755 = vand.u32 %v1079, 4294901760
    %1756 = vmatpush.msra.mxu0 %v1755
    %v1757 = vand.u32 %v1078, 4294901760
    %1758 = vmatpush.msra.mxu0 %v1757
    %v1759 = vand.u32 %v1077, 4294901760
    %1760 = vmatpush.msra.mxu0 %v1759
    %v1761 = vand.u32 %v1076, 4294901760
    %1762 = vmatpush.msra.mxu0 %v1761
    %v1763 = vand.u32 %v1075, 4294901760
    %1764 = vmatpush.msra.mxu0 %v1763
    %v1765 = vand.u32 %v1074, 4294901760
    %1766 = vmatpush.msra.mxu0 %v1765
    %v1767 = vand.u32 %v1057, 4294901760
    %1768 = vmatmul.f32.gmra.mxu0 %v1767
    %v1769 = vpop.f32.mrf.mxu0
    %v1770 = vadd.f32 %v1733, %v1769
    %1771 = vdwg.mxu0
    %vm1772 = vcmask 261120
    %1773 = vst.msk [vmem:[#allocation2] sm:$0xff] %vm1772, %v1770
    // Predicated region
    $region18: #{tpu_custom_call.1} parent=1 // pred_check
      _
    $region19: #{tpu_custom_call.1} parent=1 // pred_check_branch
      %1775 = sbr.rel (0) target = $region21
    $region20: #{tpu_custom_call.1} parent=1 // pred_region
      %1777 = vsyncadd [#allocation3], 0
      %s1779 = sshll.u32 [#allocation2], 4
      %s1780 = int_to_ptr.vmem [resolvable:$true] %s1779
      %s1781 = sshll.u32 %s4, 4
      %s1782 = int_to_ptr.hbm [resolvable:$true] %s1781
      %1784 = dma.vmem_to_hbm [thread:$0]  %s1780, 128, %s1782, [#allocation3]
    $region21: #{tpu_custom_call.1} parent=1 // pred_fallthru
      _
    // Predicated region
    $region22: #{tpu_custom_call.1} parent=1 // pred_check
      _
    $region23: #{tpu_custom_call.1} parent=1 // pred_check_branch
      %1786 = sbr.rel (0) target = $region25
    $region24: #{tpu_custom_call.1} parent=1 // pred_region
      %1788 = dma.done [#allocation3], 128
    $region25: #{tpu_custom_call.1} parent=1 // pred_fallthru
      _
    %1789 = vsyncpa [#allocation3], 1

</llo_original>
